<compile_context>
chip_gen: v7x
topology: tpu7x:2x2x1
jax: 0.10.0
libtpu: 0.0.40
codegen_flags: <defaults>
</compile_context>

<pallas_src>
import functools

import numpy as np
import jax
import jax.numpy as jnp
from jax import lax
from jax.experimental import pallas as pl
from jax.experimental.pallas import tpu as pltpu

MARGIN = 200.0          # default margin of BA_TripletLoss
POS_EPS = 1e-9          # dist_ap > 1e-9 filter from the reference loop
CLAMP_MIN = 1e-12       # dist.clamp(min=1e-12)
BIG = 1e30              # mask sentinel (kept finite so relu never sees inf-inf)
TILE = 8                # anchors per grid step (sublane granularity)
OUT_LANES = 128         # lane-dense per-anchor output rows


def _ba_tile_kernel(x_ref, tcol_ref, trow_ref, loss_ref, cnt_ref, *,
                    n_real, margin):
    g = pl.program_id(0)
    n_pad = x_ref.shape[0]

    x_all = x_ref[...]                                          # (n_pad, d)
    r0 = pl.multiple_of(g * TILE, TILE)
    x_tile = x_ref[pl.ds(r0, TILE), :]                          # (TILE, d)

    # Squared distances for this tile of anchors: (TILE, n_pad).
    sq_all = jnp.sum(x_all * x_all, axis=1).reshape(1, n_pad)   # (1, n_pad)
    sq_tile = jnp.sum(x_tile * x_tile, axis=1, keepdims=True)   # (TILE, 1)
    gram = lax.dot_general(
        x_tile, x_all,
        dimension_numbers=(((1,), (1,)), ((), ())),
        preferred_element_type=jnp.float32,
        precision=lax.Precision.HIGHEST)                        # (TILE, n_pad)
    dist = jnp.maximum(sq_tile + sq_all - 2.0 * gram, CLAMP_MIN)

    # Masks: int32 labels, explicit self-pair exclusion, padded rows/cols off.
    t_anchor = tcol_ref[...]                                    # (TILE, 1) i32
    t_all = trow_ref[...]                                       # (1, n_pad) i32
    same = t_anchor == t_all                                    # (TILE, n_pad)
    col_ids = lax.broadcasted_iota(jnp.int32, (TILE, n_pad), 1)
    row_ids = lax.broadcasted_iota(jnp.int32, (TILE, n_pad), 0) + g * TILE
    col_valid = col_ids < n_real
    row_valid = row_ids < n_real
    pos = same & (col_ids != row_ids) & (dist > POS_EPS) & col_valid & row_valid
    neg = jnp.logical_not(same) & col_valid & row_valid

    # Fold margin + masks into two rows per anchor (O(n^2) work total).
    ap = jnp.where(pos, dist + margin, -BIG)                    # (TILE, n_pad)
    dn = jnp.where(neg, dist, BIG)                              # (TILE, n_pad)

    cnt = jnp.sum(pos.astype(jnp.float32), axis=1, keepdims=True)   # (TILE, 1)
    cnt_ref[...] = jnp.broadcast_to(cnt, (TILE, OUT_LANES))

    rows = []
    for r in range(TILE):   # unrolled; each (n, n) plane is reduced immediately
        plane = jnp.maximum(ap[r][:, None] - dn[r][None, :], 0.0)   # (n_pad, n_pad)
        rows.append(jnp.full((1, OUT_LANES), jnp.sum(plane), dtype=jnp.float32))
    loss_ref[...] = jnp.concatenate(rows, axis=0)               # (TILE, OUT_LANES)


def ba_triplet_loss(inputs, targets, margin=MARGIN):
    """inputs: (n, d) float32 features; targets: (n,) integer labels."""
    n, d = inputs.shape
    n_pad = ((n + TILE - 1) // TILE) * TILE
    x = jnp.asarray(inputs, jnp.float32)
    t = jnp.asarray(targets, jnp.int32)
    if n_pad != n:
        x = jnp.pad(x, ((0, n_pad - n), (0, 0)))
        tp = jnp.pad(t, (0, n_pad - n), constant_values=-1)
    else:
        tp = t
    t_col = tp.reshape(n_pad, 1)
    t_row = tp.reshape(1, n_pad)

    kernel = functools.partial(_ba_tile_kernel, n_real=n, margin=float(margin))
    loss_rows, cnt_rows = pl.pallas_call(
        kernel,
        out_shape=(
            jax.ShapeDtypeStruct((n_pad, OUT_LANES), jnp.float32),  # per-anchor hinge sum
            jax.ShapeDtypeStruct((n_pad, OUT_LANES), jnp.float32),  # per-anchor pos count
        ),
        grid=(n_pad // TILE,),
        in_specs=[
            pl.BlockSpec((n_pad, d), lambda g: (0, 0)),     # full x, resident
            pl.BlockSpec((TILE, 1), lambda g: (g, 0)),      # anchor labels
            pl.BlockSpec((1, n_pad), lambda g: (0, 0)),     # all labels (row)
        ],
        out_specs=(
            pl.BlockSpec((TILE, OUT_LANES), lambda g: (g, 0)),
            pl.BlockSpec((TILE, OUT_LANES), lambda g: (g, 0)),
        ),
        compiler_params=pltpu.CompilerParams(
            dimension_semantics=("parallel",)),
    )(x, t_col, t_row)

    loss_per = loss_rows[:n, 0]      # per-anchor hinge sums
    pos_per = cnt_rows[:n, 0]        # per-anchor counted (anchor, pos) pairs
    loss_sum = jnp.sum(loss_per)
    count = jnp.sum(pos_per)

    # Reference's `neg_pairs` = #negatives of the LAST anchor that contributed
    # a counted positive pair (order-dependent loop artifact). Negatives per
    # anchor depend only on the labels, so compute them in plain JAX.
    same_counts = jnp.sum((t[:, None] == t[None, :]).astype(jnp.int32), axis=1)
    neg_per = (n - same_counts).astype(jnp.float32)
    last_idx = jnp.max(jnp.where(pos_per > 0, jnp.arange(n), -1))
    neg_pairs = neg_per[last_idx]
    return loss_sum / (count * neg_pairs)


def _reference_loss(x, t, margin=MARGIN):
    """Direct numpy transcription of the PyTorch forward (float64 so that the
    self-distance is robustly < 1e-9, i.e. the intended self-pair exclusion)."""
    x = np.asarray(x, np.float64)
    t = np.asarray(t)
    n = x.shape[0]
    sq = (x ** 2).sum(1, keepdims=True)
    dist = sq + sq.T - 2.0 * (x @ x.T)
    dist = np.clip(dist, CLAMP_MIN, None)
    mask = t[:, None] == t[None, :]
    loss_sum, count, neg_pairs = 0.0, 0, 0
    for i in range(n):
        d_pos = dist[i][mask[i]]
        for ind in range(len(d_pos)):
            if d_pos[ind] > POS_EPS:
                dist_ap = d_pos[ind]
            else:
                continue
            count += 1
            dist_an = dist[i][~mask[i]]
            neg_pairs = dist_an.shape[0]
            loss_sum += np.maximum(0.0, dist_ap - dist_an + margin).sum()
    return loss_sum / (count * neg_pairs)


if __name__ == "__main__":
    key = jax.random.PRNGKey(0)
    n, d, num_ids = 64, 128, 8                       # batch_size, feat_dim
    inputs = 2.0 * jax.random.normal(key, (n, d), dtype=jnp.float32)
    targets = jnp.repeat(jnp.arange(num_ids, dtype=jnp.int32), n // num_ids)

    loss = jax.jit(ba_triplet_loss)(inputs, targets)
    loss = float(jax.block_until_ready(loss))

    ref = float(_reference_loss(np.asarray(inputs), np.asarray(targets)))
    assert np.isclose(loss, ref, rtol=5e-4, atol=5e-4), (loss, ref)
    print("KERNEL_OK")
</pallas_src>

<mosaic_0001>
module attributes {stable_mosaic.version = 11 : i64} {
  func.func @_ba_tile_kernel(%arg0: i32, %arg1: memref<64x128xf32, #tpu.memory_space<vmem>>, %arg2: memref<8x1xi32, #tpu.memory_space<vmem>>, %arg3: memref<1x64xi32, #tpu.memory_space<vmem>>, %arg4: memref<8x128xf32, #tpu.memory_space<vmem>>, %arg5: memref<8x128xf32, #tpu.memory_space<vmem>>) attributes {dimension_semantics = [#tpu.dimension_semantics<parallel>], iteration_bounds = array<i64: 8>, scalar_prefetch = 0 : i64, scratch_operands = 0 : i64, tpu.core_type = #tpu.core_type<tc>, window_params = [{pipeline_mode = #tpu.pipeline_mode<synchronous>, transform_indices = @transform_0, window_bounds = array<i64: 64, 128>}, {transform_indices = @transform_1, window_bounds = array<i64: 8, 1>}, {pipeline_mode = #tpu.pipeline_mode<synchronous>, transform_indices = @transform_2, window_bounds = array<i64: 1, 64>}, {transform_indices = @transform_3, window_bounds = array<i64: 8, 128>}, {transform_indices = @transform_4, window_bounds = array<i64: 8, 128>}]} {
    %c0 = arith.constant 0 : index
    %c0_0 = arith.constant 0 : index
    %0 = vector.load %arg1[%c0, %c0_0] : memref<64x128xf32, #tpu.memory_space<vmem>>, vector<64x128xf32>
    %c8_i32 = arith.constant 8 : i32
    %1 = arith.muli %arg0, %c8_i32 : i32
    %2 = tpu.assume_multiple %1, 8 : i32
    %3 = arith.index_cast %2 : i32 to index
    %c0_1 = arith.constant 0 : index
    %4 = vector.load %arg1[%3, %c0_1] : memref<64x128xf32, #tpu.memory_space<vmem>>, vector<8x128xf32>
    %5 = arith.mulf %0, %0 : vector<64x128xf32>
    %cst = arith.constant dense<0.000000e+00> : vector<64xf32>
    %6 = vector.multi_reduction <add>, %5, %cst [1] : vector<64x128xf32> to vector<64xf32>
    %7 = vector.shape_cast %6 : vector<64xf32> to vector<1x64xf32>
    %8 = arith.mulf %4, %4 : vector<8x128xf32>
    %cst_2 = arith.constant dense<0.000000e+00> : vector<8xf32>
    %9 = vector.multi_reduction <add>, %8, %cst_2 [1] : vector<8x128xf32> to vector<8xf32>
    %10 = vector.shape_cast %9 : vector<8xf32> to vector<8x1xf32>
    %cst_3 = arith.constant dense<0.000000e+00> : vector<8x64xf32>
    %11 = tpu.matmul %4, %0, %cst_3 {dimension_numbers = #tpu.dot_dimension_numbers<[1], [1], [0], [0], [0, 0, 1, 0], [], []>, precision = #tpu.contract_precision<fp32>} : vector<8x128xf32>, vector<64x128xf32>, vector<8x64xf32> -> vector<8x64xf32>
    %12 = vector.broadcast %10 : vector<8x1xf32> to vector<8x64xf32>
    %13 = vector.broadcast %7 : vector<1x64xf32> to vector<8x64xf32>
    %14 = arith.addf %12, %13 : vector<8x64xf32>
    %cst_4 = arith.constant 2.000000e+00 : f32
    %15 = vector.broadcast %cst_4 : f32 to vector<8x64xf32>
    %16 = arith.mulf %15, %11 : vector<8x64xf32>
    %17 = arith.subf %14, %16 : vector<8x64xf32>
    %cst_5 = arith.constant 9.99999996E-13 : f32
    %18 = vector.broadcast %cst_5 : f32 to vector<8x64xf32>
    %19 = arith.maximumf %17, %18 : vector<8x64xf32>
    %c0_6 = arith.constant 0 : index
    %c0_7 = arith.constant 0 : index
    %20 = vector.load %arg2[%c0_6, %c0_7] : memref<8x1xi32, #tpu.memory_space<vmem>>, vector<8x1xi32>
    %c0_8 = arith.constant 0 : index
    %c0_9 = arith.constant 0 : index
    %21 = vector.load %arg3[%c0_8, %c0_9] : memref<1x64xi32, #tpu.memory_space<vmem>>, vector<1x64xi32>
    %22 = vector.broadcast %20 : vector<8x1xi32> to vector<8x64xi32>
    %23 = vector.broadcast %21 : vector<1x64xi32> to vector<8x64xi32>
    %24 = arith.cmpi eq, %22, %23 : vector<8x64xi32>
    %25 = tpu.iota {dimensions = array<i32: 1>} : vector<8x64xi32>
    %26 = tpu.iota {dimensions = array<i32: 0>} : vector<8x64xi32>
    %c8_i32_10 = arith.constant 8 : i32
    %27 = arith.muli %arg0, %c8_i32_10 : i32
    %28 = vector.broadcast %27 : i32 to vector<8x64xi32>
    %29 = arith.addi %26, %28 : vector<8x64xi32>
    %c64_i32 = arith.constant 64 : i32
    %30 = vector.broadcast %c64_i32 : i32 to vector<8x64xi32>
    %31 = arith.cmpi slt, %25, %30 : vector<8x64xi32>
    %c64_i32_11 = arith.constant 64 : i32
    %32 = vector.broadcast %c64_i32_11 : i32 to vector<8x64xi32>
    %33 = arith.cmpi slt, %29, %32 : vector<8x64xi32>
    %34 = arith.cmpi ne, %25, %29 : vector<8x64xi32>
    %35 = arith.andi %24, %34 : vector<8x64xi1>
    %cst_12 = arith.constant 9.99999971E-10 : f32
    %36 = vector.broadcast %cst_12 : f32 to vector<8x64xf32>
    %37 = arith.cmpf ogt, %19, %36 : vector<8x64xf32>
    %38 = arith.andi %35, %37 : vector<8x64xi1>
    %39 = arith.andi %38, %31 : vector<8x64xi1>
    %40 = arith.andi %39, %33 : vector<8x64xi1>
    %cst_13 = arith.constant dense<true> : vector<8x64xi1>
    %41 = arith.xori %24, %cst_13 : vector<8x64xi1>
    %42 = arith.andi %41, %31 : vector<8x64xi1>
    %43 = arith.andi %42, %33 : vector<8x64xi1>
    %cst_14 = arith.constant 2.000000e+02 : f32
    %44 = vector.broadcast %cst_14 : f32 to vector<8x64xf32>
    %45 = arith.addf %19, %44 : vector<8x64xf32>
    %cst_15 = arith.constant -1.000000e+30 : f32
    %46 = vector.broadcast %cst_15 : f32 to vector<8x64xf32>
    %47 = arith.select %40, %45, %46 : vector<8x64xi1>, vector<8x64xf32>
    %cst_16 = arith.constant 1.000000e+30 : f32
    %48 = vector.broadcast %cst_16 : f32 to vector<8x64xf32>
    %49 = arith.select %43, %19, %48 : vector<8x64xi1>, vector<8x64xf32>
    %50 = arith.extui %40 : vector<8x64xi1> to vector<8x64xi32>
    %51 = arith.sitofp %50 : vector<8x64xi32> to vector<8x64xf32>
    %cst_17 = arith.constant dense<0.000000e+00> : vector<8xf32>
    %52 = vector.multi_reduction <add>, %51, %cst_17 [1] : vector<8x64xf32> to vector<8xf32>
    %53 = vector.shape_cast %52 : vector<8xf32> to vector<8x1xf32>
    %54 = vector.shape_cast %53 : vector<8x1xf32> to vector<8x1xf32>
    %55 = vector.broadcast %54 : vector<8x1xf32> to vector<8x128xf32>
    %c0_18 = arith.constant 0 : index
    %c0_19 = arith.constant 0 : index
    %56 = vector.load %arg5[%c0_18, %c0_19] : memref<8x128xf32, #tpu.memory_space<vmem>>, vector<8x128xf32>
    tpu.vector_store %arg5[%c0_18, %c0_19], %55 {strides = array<i32>} : memref<8x128xf32, #tpu.memory_space<vmem>>, vector<8x128xf32>,
    %57 = vector.extract_strided_slice %47 {offsets = [0, 0], sizes = [1, 64], strides = [1, 1]} : vector<8x64xf32> to vector<1x64xf32>
    %58 = vector.shape_cast %57 : vector<1x64xf32> to vector<64xf32>
    %59 = vector.shape_cast %58 : vector<64xf32> to vector<64x1xf32>
    %60 = vector.extract_strided_slice %49 {offsets = [0, 0], sizes = [1, 64], strides = [1, 1]} : vector<8x64xf32> to vector<1x64xf32>
    %61 = vector.shape_cast %60 : vector<1x64xf32> to vector<64xf32>
    %62 = vector.shape_cast %61 : vector<64xf32> to vector<1x64xf32>
    %63 = vector.broadcast %59 : vector<64x1xf32> to vector<64x64xf32>
    %64 = vector.broadcast %62 : vector<1x64xf32> to vector<64x64xf32>
    %65 = arith.subf %63, %64 : vector<64x64xf32>
    %cst_20 = arith.constant 0.000000e+00 : f32
    %66 = vector.broadcast %cst_20 : f32 to vector<64x64xf32>
    %67 = arith.maximumf %65, %66 : vector<64x64xf32>
    %68 = vector.shape_cast %67 : vector<64x64xf32> to vector<1x64x64xf32>
    %cst_21 = arith.constant dense<0.000000e+00> : vector<1xf32>
    %69 = vector.multi_reduction <add>, %68, %cst_21 [1, 2] : vector<1x64x64xf32> to vector<1xf32>
    %70 = vector.shape_cast %69 : vector<1xf32> to vector<1x1x1xf32>
    %71 = vector.extract %70[0, 0, 0] : f32 from vector<1x1x1xf32>
    %72 = vector.broadcast %71 : f32 to vector<1x128xf32>
    %73 = vector.extract_strided_slice %47 {offsets = [1, 0], sizes = [1, 64], strides = [1, 1]} : vector<8x64xf32> to vector<1x64xf32>
    %74 = vector.shape_cast %73 : vector<1x64xf32> to vector<64xf32>
    %75 = vector.shape_cast %74 : vector<64xf32> to vector<64x1xf32>
    %76 = vector.extract_strided_slice %49 {offsets = [1, 0], sizes = [1, 64], strides = [1, 1]} : vector<8x64xf32> to vector<1x64xf32>
    %77 = vector.shape_cast %76 : vector<1x64xf32> to vector<64xf32>
    %78 = vector.shape_cast %77 : vector<64xf32> to vector<1x64xf32>
    %79 = vector.broadcast %75 : vector<64x1xf32> to vector<64x64xf32>
    %80 = vector.broadcast %78 : vector<1x64xf32> to vector<64x64xf32>
    %81 = arith.subf %79, %80 : vector<64x64xf32>
    %cst_22 = arith.constant 0.000000e+00 : f32
    %82 = vector.broadcast %cst_22 : f32 to vector<64x64xf32>
    %83 = arith.maximumf %81, %82 : vector<64x64xf32>
    %84 = vector.shape_cast %83 : vector<64x64xf32> to vector<1x64x64xf32>
    %cst_23 = arith.constant dense<0.000000e+00> : vector<1xf32>
    %85 = vector.multi_reduction <add>, %84, %cst_23 [1, 2] : vector<1x64x64xf32> to vector<1xf32>
    %86 = vector.shape_cast %85 : vector<1xf32> to vector<1x1x1xf32>
    %87 = vector.extract %86[0, 0, 0] : f32 from vector<1x1x1xf32>
    %88 = vector.broadcast %87 : f32 to vector<1x128xf32>
    %89 = vector.extract_strided_slice %47 {offsets = [2, 0], sizes = [1, 64], strides = [1, 1]} : vector<8x64xf32> to vector<1x64xf32>
    %90 = vector.shape_cast %89 : vector<1x64xf32> to vector<64xf32>
    %91 = vector.shape_cast %90 : vector<64xf32> to vector<64x1xf32>
    %92 = vector.extract_strided_slice %49 {offsets = [2, 0], sizes = [1, 64], strides = [1, 1]} : vector<8x64xf32> to vector<1x64xf32>
    %93 = vector.shape_cast %92 : vector<1x64xf32> to vector<64xf32>
    %94 = vector.shape_cast %93 : vector<64xf32> to vector<1x64xf32>
    %95 = vector.broadcast %91 : vector<64x1xf32> to vector<64x64xf32>
    %96 = vector.broadcast %94 : vector<1x64xf32> to vector<64x64xf32>
    %97 = arith.subf %95, %96 : vector<64x64xf32>
    %cst_24 = arith.constant 0.000000e+00 : f32
    %98 = vector.broadcast %cst_24 : f32 to vector<64x64xf32>
    %99 = arith.maximumf %97, %98 : vector<64x64xf32>
    %100 = vector.shape_cast %99 : vector<64x64xf32> to vector<1x64x64xf32>
    %cst_25 = arith.constant dense<0.000000e+00> : vector<1xf32>
    %101 = vector.multi_reduction <add>, %100, %cst_25 [1, 2] : vector<1x64x64xf32> to vector<1xf32>
    %102 = vector.shape_cast %101 : vector<1xf32> to vector<1x1x1xf32>
    %103 = vector.extract %102[0, 0, 0] : f32 from vector<1x1x1xf32>
    %104 = vector.broadcast %103 : f32 to vector<1x128xf32>
    %105 = vector.extract_strided_slice %47 {offsets = [3, 0], sizes = [1, 64], strides = [1, 1]} : vector<8x64xf32> to vector<1x64xf32>
    %106 = vector.shape_cast %105 : vector<1x64xf32> to vector<64xf32>
    %107 = vector.shape_cast %106 : vector<64xf32> to vector<64x1xf32>
    %108 = vector.extract_strided_slice %49 {offsets = [3, 0], sizes = [1, 64], strides = [1, 1]} : vector<8x64xf32> to vector<1x64xf32>
    %109 = vector.shape_cast %108 : vector<1x64xf32> to vector<64xf32>
    %110 = vector.shape_cast %109 : vector<64xf32> to vector<1x64xf32>
    %111 = vector.broadcast %107 : vector<64x1xf32> to vector<64x64xf32>
    %112 = vector.broadcast %110 : vector<1x64xf32> to vector<64x64xf32>
    %113 = arith.subf %111, %112 : vector<64x64xf32>
    %cst_26 = arith.constant 0.000000e+00 : f32
    %114 = vector.broadcast %cst_26 : f32 to vector<64x64xf32>
    %115 = arith.maximumf %113, %114 : vector<64x64xf32>
    %116 = vector.shape_cast %115 : vector<64x64xf32> to vector<1x64x64xf32>
    %cst_27 = arith.constant dense<0.000000e+00> : vector<1xf32>
    %117 = vector.multi_reduction <add>, %116, %cst_27 [1, 2] : vector<1x64x64xf32> to vector<1xf32>
    %118 = vector.shape_cast %117 : vector<1xf32> to vector<1x1x1xf32>
    %119 = vector.extract %118[0, 0, 0] : f32 from vector<1x1x1xf32>
    %120 = vector.broadcast %119 : f32 to vector<1x128xf32>
    %121 = vector.extract_strided_slice %47 {offsets = [4, 0], sizes = [1, 64], strides = [1, 1]} : vector<8x64xf32> to vector<1x64xf32>
    %122 = vector.shape_cast %121 : vector<1x64xf32> to vector<64xf32>
    %123 = vector.shape_cast %122 : vector<64xf32> to vector<64x1xf32>
    %124 = vector.extract_strided_slice %49 {offsets = [4, 0], sizes = [1, 64], strides = [1, 1]} : vector<8x64xf32> to vector<1x64xf32>
    %125 = vector.shape_cast %124 : vector<1x64xf32> to vector<64xf32>
    %126 = vector.shape_cast %125 : vector<64xf32> to vector<1x64xf32>
    %127 = vector.broadcast %123 : vector<64x1xf32> to vector<64x64xf32>
    %128 = vector.broadcast %126 : vector<1x64xf32> to vector<64x64xf32>
    %129 = arith.subf %127, %128 : vector<64x64xf32>
    %cst_28 = arith.constant 0.000000e+00 : f32
    %130 = vector.broadcast %cst_28 : f32 to vector<64x64xf32>
    %131 = arith.maximumf %129, %130 : vector<64x64xf32>
    %132 = vector.shape_cast %131 : vector<64x64xf32> to vector<1x64x64xf32>
    %cst_29 = arith.constant dense<0.000000e+00> : vector<1xf32>
    %133 = vector.multi_reduction <add>, %132, %cst_29 [1, 2] : vector<1x64x64xf32> to vector<1xf32>
    %134 = vector.shape_cast %133 : vector<1xf32> to vector<1x1x1xf32>
    %135 = vector.extract %134[0, 0, 0] : f32 from vector<1x1x1xf32>
    %136 = vector.broadcast %135 : f32 to vector<1x128xf32>
    %137 = vector.extract_strided_slice %47 {offsets = [5, 0], sizes = [1, 64], strides = [1, 1]} : vector<8x64xf32> to vector<1x64xf32>
    %138 = vector.shape_cast %137 : vector<1x64xf32> to vector<64xf32>
    %139 = vector.shape_cast %138 : vector<64xf32> to vector<64x1xf32>
    %140 = vector.extract_strided_slice %49 {offsets = [5, 0], sizes = [1, 64], strides = [1, 1]} : vector<8x64xf32> to vector<1x64xf32>
    %141 = vector.shape_cast %140 : vector<1x64xf32> to vector<64xf32>
    %142 = vector.shape_cast %141 : vector<64xf32> to vector<1x64xf32>
    %143 = vector.broadcast %139 : vector<64x1xf32> to vector<64x64xf32>
    %144 = vector.broadcast %142 : vector<1x64xf32> to vector<64x64xf32>
    %145 = arith.subf %143, %144 : vector<64x64xf32>
    %cst_30 = arith.constant 0.000000e+00 : f32
    %146 = vector.broadcast %cst_30 : f32 to vector<64x64xf32>
    %147 = arith.maximumf %145, %146 : vector<64x64xf32>
    %148 = vector.shape_cast %147 : vector<64x64xf32> to vector<1x64x64xf32>
    %cst_31 = arith.constant dense<0.000000e+00> : vector<1xf32>
    %149 = vector.multi_reduction <add>, %148, %cst_31 [1, 2] : vector<1x64x64xf32> to vector<1xf32>
    %150 = vector.shape_cast %149 : vector<1xf32> to vector<1x1x1xf32>
    %151 = vector.extract %150[0, 0, 0] : f32 from vector<1x1x1xf32>
    %152 = vector.broadcast %151 : f32 to vector<1x128xf32>
    %153 = vector.extract_strided_slice %47 {offsets = [6, 0], sizes = [1, 64], strides = [1, 1]} : vector<8x64xf32> to vector<1x64xf32>
    %154 = vector.shape_cast %153 : vector<1x64xf32> to vector<64xf32>
    %155 = vector.shape_cast %154 : vector<64xf32> to vector<64x1xf32>
    %156 = vector.extract_strided_slice %49 {offsets = [6, 0], sizes = [1, 64], strides = [1, 1]} : vector<8x64xf32> to vector<1x64xf32>
    %157 = vector.shape_cast %156 : vector<1x64xf32> to vector<64xf32>
    %158 = vector.shape_cast %157 : vector<64xf32> to vector<1x64xf32>
    %159 = vector.broadcast %155 : vector<64x1xf32> to vector<64x64xf32>
    %160 = vector.broadcast %158 : vector<1x64xf32> to vector<64x64xf32>
    %161 = arith.subf %159, %160 : vector<64x64xf32>
    %cst_32 = arith.constant 0.000000e+00 : f32
    %162 = vector.broadcast %cst_32 : f32 to vector<64x64xf32>
    %163 = arith.maximumf %161, %162 : vector<64x64xf32>
    %164 = vector.shape_cast %163 : vector<64x64xf32> to vector<1x64x64xf32>
    %cst_33 = arith.constant dense<0.000000e+00> : vector<1xf32>
    %165 = vector.multi_reduction <add>, %164, %cst_33 [1, 2] : vector<1x64x64xf32> to vector<1xf32>
    %166 = vector.shape_cast %165 : vector<1xf32> to vector<1x1x1xf32>
    %167 = vector.extract %166[0, 0, 0] : f32 from vector<1x1x1xf32>
    %168 = vector.broadcast %167 : f32 to vector<1x128xf32>
    %169 = vector.extract_strided_slice %47 {offsets = [7, 0], sizes = [1, 64], strides = [1, 1]} : vector<8x64xf32> to vector<1x64xf32>
    %170 = vector.shape_cast %169 : vector<1x64xf32> to vector<64xf32>
    %171 = vector.shape_cast %170 : vector<64xf32> to vector<64x1xf32>
    %172 = vector.extract_strided_slice %49 {offsets = [7, 0], sizes = [1, 64], strides = [1, 1]} : vector<8x64xf32> to vector<1x64xf32>
    %173 = vector.shape_cast %172 : vector<1x64xf32> to vector<64xf32>
    %174 = vector.shape_cast %173 : vector<64xf32> to vector<1x64xf32>
    %175 = vector.broadcast %171 : vector<64x1xf32> to vector<64x64xf32>
    %176 = vector.broadcast %174 : vector<1x64xf32> to vector<64x64xf32>
    %177 = arith.subf %175, %176 : vector<64x64xf32>
    %cst_34 = arith.constant 0.000000e+00 : f32
    %178 = vector.broadcast %cst_34 : f32 to vector<64x64xf32>
    %179 = arith.maximumf %177, %178 : vector<64x64xf32>
    %180 = vector.shape_cast %179 : vector<64x64xf32> to vector<1x64x64xf32>
    %cst_35 = arith.constant dense<0.000000e+00> : vector<1xf32>
    %181 = vector.multi_reduction <add>, %180, %cst_35 [1, 2] : vector<1x64x64xf32> to vector<1xf32>
    %182 = vector.shape_cast %181 : vector<1xf32> to vector<1x1x1xf32>
    %183 = vector.extract %182[0, 0, 0] : f32 from vector<1x1x1xf32>
    %184 = vector.broadcast %183 : f32 to vector<1x128xf32>
    %185 = tpu.concatenate %72, %88, %104, %120, %136, %152, %168, %184 in 0 : vector<1x128xf32>, vector<1x128xf32>, vector<1x128xf32>, vector<1x128xf32>, vector<1x128xf32>, vector<1x128xf32>, vector<1x128xf32>, vector<1x128xf32> -> vector<8x128xf32>
    %c0_36 = arith.constant 0 : index
    %c0_37 = arith.constant 0 : index
    %186 = vector.load %arg4[%c0_36, %c0_37] : memref<8x128xf32, #tpu.memory_space<vmem>>, vector<8x128xf32>
    tpu.vector_store %arg4[%c0_36, %c0_37], %185 {strides = array<i32>} : memref<8x128xf32, #tpu.memory_space<vmem>>, vector<8x128xf32>,
    return
  }
  func.func @transform_0(%arg0: i32) -> (i32, i32) {
    %c0_i32 = arith.constant 0 : i32
    %c0_i32_0 = arith.constant 0 : i32
    %c0_i32_1 = arith.constant 0 : i32
    return %c0_i32, %c0_i32_0 : i32, i32
  }
  func.func @transform_1(%arg0: i32) -> (i32, i32) {
    %c0_i32 = arith.constant 0 : i32
    %c0_i32_0 = arith.constant 0 : i32
    return %arg0, %c0_i32 : i32, i32
  }
  func.func @transform_2(%arg0: i32) -> (i32, i32) {
    %c0_i32 = arith.constant 0 : i32
    %c0_i32_0 = arith.constant 0 : i32
    %c0_i32_1 = arith.constant 0 : i32
    return %c0_i32, %c0_i32_0 : i32, i32
  }
  func.func @transform_3(%arg0: i32) -> (i32, i32) {
    %c0_i32 = arith.constant 0 : i32
    %c0_i32_0 = arith.constant 0 : i32
    return %arg0, %c0_i32 : i32, i32
  }
  func.func @transform_4(%arg0: i32) -> (i32, i32) {
    %c0_i32 = arith.constant 0 : i32
    %c0_i32_0 = arith.constant 0 : i32
    return %arg0, %c0_i32 : i32, i32
  }
}

</mosaic_0001>

<llo_original>
// kernel: ba_triplet_loss.1
$region0: #{ba_triplet_loss.1}
  #allocation0 [shape = 'u32[]', space=smem, size = 0x4, offset = 0x4, fixed_abs, tag = 'smem constant byte address 0x4 - core index']
  #allocation1 [shape = 'u32[144,128]{1,0:T(1,128)}', space=vmem, size = 0x12000, scoped, tag = 'internal scratch']
  %s0 = inlined_call_operand.vmem [shape: f32[64,128], index: 0, kind: input, shape index: {}]
  %s1 = inlined_call_operand.vmem [shape: s32[64,1], index: 1, kind: input, shape index: {}]
  %s2 = inlined_call_operand.vmem [shape: s32[1,64], index: 2, kind: input, shape index: {}]
  %s3 = inlined_call_operand.vmem [shape: f32[64,128], index: 3, kind: output, shape index: {0}]
  %s4 = inlined_call_operand.vmem [shape: f32[64,128], index: 4, kind: output, shape index: {1}]
  %5 = xla_tuple %s3, %s4
  %s6 = sld [smem:[#allocation0]]
  $region53: #{ba_triplet_loss.1} parent=0
    _
  %s8 = ssub.s32 1, %s6
  %s9 = scalar_select 0, %s8, %s6
  loop: start=0, step=1, limit=10
  $region2: #{ba_triplet_loss.1} parent=0 // loop_pre_header
    _
  $region3: #{ba_triplet_loss.1} parent=0 // loop_header
    %s11 = sphi 0, %s15
    %p12 = scmp.ge.s32.totalorder %s11, 10
    %s19 = sphi 0, %s19
    %s21 = sphi 0, %s19
    %s22 = sphi 0, %s21
    %s36 = sphi 0, %s22
    %s42 = sphi 0, %s44
    %s45 = sphi 0, %s42
    %s46 = sphi 0, %s45
    %s62 = sphi 0, %s46
    %s66 = sphi 0, %s66
    %s68 = sphi 0, %s66
    %s69 = sphi 0, %s68
    %s83 = sphi 0, %s69
    %s89 = sphi 0, %s91
    %s92 = sphi 0, %s89
    %s93 = sphi 0, %s92
    %s109 = sphi 0, %s93
    %s115 = sphi 0, %s117
    %s118 = sphi 0, %s115
    %s119 = sphi 0, %s118
    %s135 = sphi 0, %s119
  $region4: #{ba_triplet_loss.1} parent=0 // loop_header_branch
    %14 = sbr.rel (%p12) target = $region8
  $region5: #{ba_triplet_loss.1} parent=0 // loop_body
    %s16 = ssub.s32 %s11, 1
    %s17 = ssub.s32 %s11, 2
    %s18 = sadd.s32 %s11, 1
    %s20 = sadd.s32 %s19, 1
    %p23 = scmp.eq.s32.totalorder %s11, 7
    %p24 = scmp.ne.s32.totalorder %s19, %s21
    %p25 = scmp.eq.s32.totalorder %s11, 0
    %p26 = por %p24, %p25
    %p27 = scmp.ne.s32.totalorder %s19, %s21
    %p28 = scmp.eq.s32.totalorder %s16, 7
    %p29 = por %p27, %p28
    %p30 = scmp.ne.s32.totalorder %s21, %s22
    %p31 = scmp.eq.s32.totalorder %s16, 0
    %p32 = por %p30, %p31
    %p33 = scmp.ne.s32.totalorder %s21, %s22
    %p34 = scmp.eq.s32.totalorder %s17, 7
    %p35 = por %p33, %p34
    %p37 = scmp.ne.s32.totalorder %s22, %s36
    %p38 = scmp.eq.s32.totalorder %s17, 0
    %p39 = por %p37, %p38
    %s40 = ssub.s32 %s11, %s18
    %p41 = scmp.eq.s32.totalorder %s40, 0
    %s43 = sadd.s32 %s42, 1
    %s44 = scalar_select %p41, %s42, %s43
    %p47 = pneg %p41
    %p48 = scmp.eq.s32.totalorder %s11, 7
    %p49 = por %p47, %p48
    %p50 = scmp.ne.s32.totalorder %s42, %s45
    %p51 = scmp.eq.s32.totalorder %s11, 0
    %p52 = por %p50, %p51
    %p53 = scmp.ne.s32.totalorder %s42, %s45
    %p54 = scmp.eq.s32.totalorder %s16, 7
    %p55 = por %p53, %p54
    %p56 = scmp.ne.s32.totalorder %s45, %s46
    %p57 = scmp.eq.s32.totalorder %s16, 0
    %p58 = por %p56, %p57
    %p59 = scmp.ne.s32.totalorder %s45, %s46
    %p60 = scmp.eq.s32.totalorder %s17, 7
    %p61 = por %p59, %p60
    %p63 = scmp.ne.s32.totalorder %s46, %s62
    %p64 = scmp.eq.s32.totalorder %s17, 0
    %p65 = por %p63, %p64
    %s67 = sadd.s32 %s66, 1
    %p70 = scmp.eq.s32.totalorder %s11, 7
    %p71 = scmp.ne.s32.totalorder %s66, %s68
    %p72 = scmp.eq.s32.totalorder %s11, 0
    %p73 = por %p71, %p72
    %p74 = scmp.ne.s32.totalorder %s66, %s68
    %p75 = scmp.eq.s32.totalorder %s16, 7
    %p76 = por %p74, %p75
    %p77 = scmp.ne.s32.totalorder %s68, %s69
    %p78 = scmp.eq.s32.totalorder %s16, 0
    %p79 = por %p77, %p78
    %p80 = scmp.ne.s32.totalorder %s68, %s69
    %p81 = scmp.eq.s32.totalorder %s17, 7
    %p82 = por %p80, %p81
    %p84 = scmp.ne.s32.totalorder %s69, %s83
    %p85 = scmp.eq.s32.totalorder %s17, 0
    %p86 = por %p84, %p85
    %s87 = ssub.s32 %s11, %s18
    %p88 = scmp.eq.s32.totalorder %s87, 0
    %s90 = sadd.s32 %s89, 1
    %s91 = scalar_select %p88, %s89, %s90
    %p94 = pneg %p88
    %p95 = scmp.eq.s32.totalorder %s11, 7
    %p96 = por %p94, %p95
    %p97 = scmp.ne.s32.totalorder %s89, %s92
    %p98 = scmp.eq.s32.totalorder %s11, 0
    %p99 = por %p97, %p98
    %p100 = scmp.ne.s32.totalorder %s89, %s92
    %p101 = scmp.eq.s32.totalorder %s16, 7
    %p102 = por %p100, %p101
    %p103 = scmp.ne.s32.totalorder %s92, %s93
    %p104 = scmp.eq.s32.totalorder %s16, 0
    %p105 = por %p103, %p104
    %p106 = scmp.ne.s32.totalorder %s92, %s93
    %p107 = scmp.eq.s32.totalorder %s17, 7
    %p108 = por %p106, %p107
    %p110 = scmp.ne.s32.totalorder %s93, %s109
    %p111 = scmp.eq.s32.totalorder %s17, 0
    %p112 = por %p110, %p111
    %s113 = ssub.s32 %s11, %s18
    %p114 = scmp.eq.s32.totalorder %s113, 0
    %s116 = sadd.s32 %s115, 1
    %s117 = scalar_select %p114, %s115, %s116
    %p120 = pneg %p114
    %p121 = scmp.eq.s32.totalorder %s11, 7
    %p122 = por %p120, %p121
    %p123 = scmp.ne.s32.totalorder %s115, %s118
    %p124 = scmp.eq.s32.totalorder %s11, 0
    %p125 = por %p123, %p124
    %p126 = scmp.ne.s32.totalorder %s115, %s118
    %p127 = scmp.eq.s32.totalorder %s16, 7
    %p128 = por %p126, %p127
    %p129 = scmp.ne.s32.totalorder %s118, %s119
    %p130 = scmp.eq.s32.totalorder %s16, 0
    %p131 = por %p129, %p130
    %p132 = scmp.ne.s32.totalorder %s118, %s119
    %p133 = scmp.eq.s32.totalorder %s17, 7
    %p134 = por %p132, %p133
    %p136 = scmp.ne.s32.totalorder %s119, %s135
    %p137 = scmp.eq.s32.totalorder %s17, 0
    %p138 = por %p136, %p137
    %p139 = scmp.le.s32.totalorder 1, %s11
    %p140 = scmp.lt.s32.totalorder %s11, 9
    %p141 = pnand %p139, %p140
    %p142 = pneg %p141
    // Predicated region
    $region9: #{ba_triplet_loss.1} parent=5 // pred_check
      _
    $region10: #{ba_triplet_loss.1} parent=5 // pred_check_branch
      %144 = sbr.rel (%p141) target = $region12
    $region11: #{ba_triplet_loss.1} parent=5 // pred_region
      %s145 = ssub.s32 %s11, 1
      // Predicated region
      $region13: #{ba_triplet_loss.1} parent=11 // pred_check
        %p146 = pneg %p32
      $region14: #{ba_triplet_loss.1} parent=11 // pred_check_branch
        %148 = sbr.rel (%p146) target = $region16
      $region15: #{ba_triplet_loss.1} parent=11 // pred_region
        _
      $region16: #{ba_triplet_loss.1} parent=11 // pred_fallthru
        _
      // Predicated region
      $region17: #{ba_triplet_loss.1} parent=11 // pred_check
        %p149 = pneg %p79
      $region18: #{ba_triplet_loss.1} parent=11 // pred_check_branch
        %151 = sbr.rel (%p149) target = $region20
      $region19: #{ba_triplet_loss.1} parent=11 // pred_region
        _
      $region20: #{ba_triplet_loss.1} parent=11 // pred_fallthru
        _
    $region12: #{ba_triplet_loss.1} parent=5 // pred_fallthru
      _
    %p152 = scmp.lt.s32.totalorder %s11, 8
    // Predicated region
    $region21: #{ba_triplet_loss.1} parent=5 // pred_check
      %p153 = pneg %p152
    $region22: #{ba_triplet_loss.1} parent=5 // pred_check_branch
      %155 = sbr.rel (%p153) target = $region24
    $region23: #{ba_triplet_loss.1} parent=5 // pred_region
      // Predicated region
      $region25: #{ba_triplet_loss.1} parent=23 // pred_check
        %p156 = pneg %p52
      $region26: #{ba_triplet_loss.1} parent=23 // pred_check_branch
        %158 = sbr.rel (%p156) target = $region28
      $region27: #{ba_triplet_loss.1} parent=23 // pred_region
        %p159 = scmp.lt.s32.totalorder %s11, 7
        %s160 = scalar_select %p159, %s11, 7
        %s161 = smul.addr %s160, 8
        %s162 = scalar_lea.vmem %s1, %s161
      $region28: #{ba_triplet_loss.1} parent=23 // pred_fallthru
        _
    $region24: #{ba_triplet_loss.1} parent=5 // pred_fallthru
      _
    %p163 = scmp.le.s32.totalorder 1, %s11
    %p164 = scmp.lt.s32.totalorder %s11, 9
    %p165 = pnand %p163, %p164
    %p166 = pneg %p165
    // Predicated region
    $region29: #{ba_triplet_loss.1} parent=5 // pred_check
      _
    $region30: #{ba_triplet_loss.1} parent=5 // pred_check_branch
      %168 = sbr.rel (%p165) target = $region32
    $region31: #{ba_triplet_loss.1} parent=5 // pred_region
      %s169 = ssub.s32 %s11, 1
      %p170 = pneg %p32
      %p171 = pneg %p29
      %p172 = scmp.lt.s32.totalorder %s16, 7
      %s173 = scalar_select %p172, %s16, 7
      %s174 = smul.addr %s173, 8
      %s175 = scalar_lea.vmem %s1, %s174
      %p176 = pneg %p58
      %p177 = pneg %p55
      %p178 = pneg %p79
      %p179 = pneg %p76
      %p180 = pneg %p105
      %p181 = pneg %p102
      %p182 = scmp.lt.s32.totalorder %s16, 7
      %s183 = scalar_select %p182, %s16, 7
      %s184 = smul.addr %s183, 8
      %s185 = scalar_lea.vmem %s3, %s184
      %p186 = pneg %p131
      %p187 = pneg %p128
      %p188 = scmp.lt.s32.totalorder %s16, 7
      %s189 = scalar_select %p188, %s16, 7
      %s190 = smul.addr %s189, 8
      %s191 = scalar_lea.vmem %s4, %s190
      %p192 = scmp.lt.s32.totalorder %s16, 7
      %s193 = scalar_select %p192, %s16, 7
      %s194 = smul.addr %s193, 8
      %s195 = scalar_lea.vmem %s1, %s194
      %p196 = scmp.lt.s32.totalorder %s16, 7
      %s197 = scalar_select %p196, %s16, 7
      %s198 = smul.addr %s197, 8
      %s199 = scalar_lea.vmem %s3, %s198
      %p200 = scmp.lt.s32.totalorder %s16, 7
      %s201 = scalar_select %p200, %s16, 7
      %s202 = smul.addr %s201, 8
      %s203 = scalar_lea.vmem %s4, %s202
      %v204 = vld [vmem:[%s0] sm:$0xff]
      %v205 = vld [vmem:[%s0 + $0x8] sm:$0xff]
      %v206 = vld [vmem:[%s0 + $0x10] sm:$0xff]
      %v207 = vld [vmem:[%s0 + $0x18] sm:$0xff]
      %v208 = vld [vmem:[%s0 + $0x20] sm:$0xff]
      %v209 = vld [vmem:[%s0 + $0x28] sm:$0xff]
      %v210 = vld [vmem:[%s0 + $0x30] sm:$0xff]
      %v211 = vld [vmem:[%s0 + $0x38] sm:$0xff]
      %s212 = smul.u32 %s16, 8
      %s213 = scalar_lea.vmem %s0, %s212
      %v214 = vld [vmem:[%s213] sm:$0xff]
      %v215 = vmul.f32 %v204, %v204
      %v216 = vmul.f32 %v205, %v205
      %v217 = vmul.f32 %v206, %v206
      %v218 = vmul.f32 %v207, %v207
      %v219 = vmul.f32 %v208, %v208
      %v220 = vmul.f32 %v209, %v209
      %v221 = vmul.f32 %v210, %v210
      %v222 = vmul.f32 %v211, %v211
      %223 = vadd.xlane.f32.xlu0 %v215
      %v224 = vpop.xlane.xlu0 %223
      %225 = vadd.xlane.f32.xlu0 %v216
      %v226 = vpop.xlane.xlu0 %225
      %227 = vadd.xlane.f32.xlu0 %v217
      %v228 = vpop.xlane.xlu0 %227
      %229 = vadd.xlane.f32.xlu0 %v218
      %v230 = vpop.xlane.xlu0 %229
      %231 = vadd.xlane.f32.xlu0 %v219
      %v232 = vpop.xlane.xlu0 %231
      %233 = vadd.xlane.f32.xlu0 %v220
      %v234 = vpop.xlane.xlu0 %233
      %235 = vadd.xlane.f32.xlu0 %v221
      %v236 = vpop.xlane.xlu0 %235
      %237 = vadd.xlane.f32.xlu0 %v222
      %v238 = vpop.xlane.xlu0 %237
      %v239 = vmul.f32 %v214, %v214
      %240 = vadd.xlane.f32.xlu0 %v239
      %v241 = vpop.xlane.xlu0 %240
      %242 = vmatprep.subr.mxu0 0.0
      %v243 = vand.u32 %v204, 4294901760
      %244 = vmatpush1.xpose.msra.mxu0 %v243
      %245 = vmatprep.subr.mxu0 0.0
      %v246 = vand.u32 %v205, 4294901760
      %247 = vmatpush1.xpose.msra.mxu0 %v246
      %248 = vmatprep.subr.mxu0 0.0
      %v249 = vand.u32 %v206, 4294901760
      %250 = vmatpush1.xpose.msra.mxu0 %v249
      %251 = vmatprep.subr.mxu0 0.0
      %v252 = vand.u32 %v207, 4294901760
      %253 = vmatpush1.xpose.msra.mxu0 %v252
      %254 = vmatprep.subr.mxu0 0.0
      %v255 = vand.u32 %v208, 4294901760
      %256 = vmatpush1.xpose.msra.mxu0 %v255
      %257 = vmatprep.subr.mxu0 0.0
      %v258 = vand.u32 %v209, 4294901760
      %259 = vmatpush1.xpose.msra.mxu0 %v258
      %260 = vmatprep.subr.mxu0 0.0
      %v261 = vand.u32 %v210, 4294901760
      %262 = vmatpush1.xpose.msra.mxu0 %v261
      %263 = vmatprep.subr.mxu0 0.0
      %v264 = vand.u32 %v211, 4294901760
      %265 = vmatpush1.xpose.msra.mxu0 %v264
      %266 = vmatprep.subr.mxu0 0.0
      %267 = vmatpush1.xpose.msra.mxu0 0.0
      %268 = vmatprep.subr.mxu0 0.0
      %269 = vmatpush1.xpose.msra.mxu0 0.0
      %270 = vmatprep.subr.mxu0 0.0
      %271 = vmatpush1.xpose.msra.mxu0 0.0
      %272 = vmatprep.subr.mxu0 0.0
      %273 = vmatpush1.xpose.msra.mxu0 0.0
      %274 = vmatprep.subr.mxu0 0.0
      %275 = vmatpush1.xpose.msra.mxu0 0.0
      %276 = vmatprep.subr.mxu0 0.0
      %277 = vmatpush1.xpose.msra.mxu0 0.0
      %278 = vmatprep.subr.mxu0 0.0
      %279 = vmatpush1.xpose.msra.mxu0 0.0
      %280 = vmatprep.subr.mxu0 0.0
      %281 = vmatpush1.xpose.msra.mxu0 0.0
      %282 = vmatprep.subr.mxu0 0.0
      %283 = vmatpush1.xpose.msra.mxu0 0.0
      %284 = vmatprep.subr.mxu0 0.0
      %285 = vmatpush1.xpose.msra.mxu0 0.0
      %286 = vmatprep.subr.mxu0 0.0
      %287 = vmatpush1.xpose.msra.mxu0 0.0
      %288 = vmatprep.subr.mxu0 0.0
      %289 = vmatpush1.xpose.msra.mxu0 0.0
      %290 = vmatprep.subr.mxu0 0.0
      %291 = vmatpush1.xpose.msra.mxu0 0.0
      %292 = vmatprep.subr.mxu0 0.0
      %293 = vmatpush1.xpose.msra.mxu0 0.0
      %294 = vmatprep.subr.mxu0 0.0
      %295 = vmatpush1.xpose.msra.mxu0 0.0
      %296 = vmatprep.subr.mxu0 0.0
      %297 = vmatpush1.xpose.msra.mxu0 0.0
      %298 = vmatprep.subr.mxu0 0.0
      %299 = vmatpush1.xpose.msra.mxu0 0.0
      %300 = vmatprep.subr.mxu0 0.0
      %301 = vmatpush1.xpose.msra.mxu0 0.0
      %302 = vmatprep.subr.mxu0 0.0
      %303 = vmatpush1.xpose.msra.mxu0 0.0
      %304 = vmatprep.subr.mxu0 0.0
      %305 = vmatpush1.xpose.msra.mxu0 0.0
      %306 = vmatprep.subr.mxu0 0.0
      %307 = vmatpush1.xpose.msra.mxu0 0.0
      %308 = vmatprep.subr.mxu0 0.0
      %309 = vmatpush1.xpose.msra.mxu0 0.0
      %310 = vmatprep.subr.mxu0 0.0
      %311 = vmatpush1.xpose.msra.mxu0 0.0
      %312 = vmatprep.subr.mxu0 0.0
      %313 = vmatpush1.xpose.msra.mxu0 0.0
      %314 = vmatprep.mubr.f32.mxu0 0.0
      %v315 = vand.u32 %v214, 4294901760
      %v316 = vsub.f32 %v214, %v315
      %v317 = vand.u32 %v316, 4294901760
      %v318 = vsub.f32 %v316, %v317
      %v319 = vand.u32 %v318, 4294901760
      %320 = vmatmul.mubr.f32.gmra.mrb[0].mxu0 %v319
      %v321 = vpop.f32.mrb[0].mxu0
      %v322 = vadd.f32 0.0, %v321
      %v323 = vpop.f32.mrb[0].mxu0
      %324 = vdwg.mxu0
      %325 = vmatprep.subr.mxu0 0.0
      %v326 = vand.u32 %v204, 4294901760
      %v327 = vsub.f32 %v204, %v326
      %v328 = vand.u32 %v327, 4294901760
      %v329 = vsub.f32 %v327, %v328
      %v330 = vand.u32 %v329, 4294901760
      %331 = vmatpush1.xpose.msra.mxu0 %v330
      %332 = vmatprep.subr.mxu0 0.0
      %v333 = vand.u32 %v205, 4294901760
      %v334 = vsub.f32 %v205, %v333
      %v335 = vand.u32 %v334, 4294901760
      %v336 = vsub.f32 %v334, %v335
      %v337 = vand.u32 %v336, 4294901760
      %338 = vmatpush1.xpose.msra.mxu0 %v337
      %339 = vmatprep.subr.mxu0 0.0
      %v340 = vand.u32 %v206, 4294901760
      %v341 = vsub.f32 %v206, %v340
      %v342 = vand.u32 %v341, 4294901760
      %v343 = vsub.f32 %v341, %v342
      %v344 = vand.u32 %v343, 4294901760
      %345 = vmatpush1.xpose.msra.mxu0 %v344
      %346 = vmatprep.subr.mxu0 0.0
      %v347 = vand.u32 %v207, 4294901760
      %v348 = vsub.f32 %v207, %v347
      %v349 = vand.u32 %v348, 4294901760
      %v350 = vsub.f32 %v348, %v349
      %v351 = vand.u32 %v350, 4294901760
      %352 = vmatpush1.xpose.msra.mxu0 %v351
      %353 = vmatprep.subr.mxu0 0.0
      %v354 = vand.u32 %v208, 4294901760
      %v355 = vsub.f32 %v208, %v354
      %v356 = vand.u32 %v355, 4294901760
      %v357 = vsub.f32 %v355, %v356
      %v358 = vand.u32 %v357, 4294901760
      %359 = vmatpush1.xpose.msra.mxu0 %v358
      %360 = vmatprep.subr.mxu0 0.0
      %v361 = vand.u32 %v209, 4294901760
      %v362 = vsub.f32 %v209, %v361
      %v363 = vand.u32 %v362, 4294901760
      %v364 = vsub.f32 %v362, %v363
      %v365 = vand.u32 %v364, 4294901760
      %366 = vmatpush1.xpose.msra.mxu0 %v365
      %367 = vmatprep.subr.mxu0 0.0
      %v368 = vand.u32 %v210, 4294901760
      %v369 = vsub.f32 %v210, %v368
      %v370 = vand.u32 %v369, 4294901760
      %v371 = vsub.f32 %v369, %v370
      %v372 = vand.u32 %v371, 4294901760
      %373 = vmatpush1.xpose.msra.mxu0 %v372
      %374 = vmatprep.subr.mxu0 0.0
      %v375 = vand.u32 %v211, 4294901760
      %v376 = vsub.f32 %v211, %v375
      %v377 = vand.u32 %v376, 4294901760
      %v378 = vsub.f32 %v376, %v377
      %v379 = vand.u32 %v378, 4294901760
      %380 = vmatpush1.xpose.msra.mxu0 %v379
      %381 = vmatprep.subr.mxu0 0.0
      %382 = vmatpush1.xpose.msra.mxu0 0.0
      %383 = vmatprep.subr.mxu0 0.0
      %384 = vmatpush1.xpose.msra.mxu0 0.0
      %385 = vmatprep.subr.mxu0 0.0
      %386 = vmatpush1.xpose.msra.mxu0 0.0
      %387 = vmatprep.subr.mxu0 0.0
      %388 = vmatpush1.xpose.msra.mxu0 0.0
      %389 = vmatprep.subr.mxu0 0.0
      %390 = vmatpush1.xpose.msra.mxu0 0.0
      %391 = vmatprep.subr.mxu0 0.0
      %392 = vmatpush1.xpose.msra.mxu0 0.0
      %393 = vmatprep.subr.mxu0 0.0
      %394 = vmatpush1.xpose.msra.mxu0 0.0
      %395 = vmatprep.subr.mxu0 0.0
      %396 = vmatpush1.xpose.msra.mxu0 0.0
      %397 = vmatprep.subr.mxu0 0.0
      %398 = vmatpush1.xpose.msra.mxu0 0.0
      %399 = vmatprep.subr.mxu0 0.0
      %400 = vmatpush1.xpose.msra.mxu0 0.0
      %401 = vmatprep.subr.mxu0 0.0
      %402 = vmatpush1.xpose.msra.mxu0 0.0
      %403 = vmatprep.subr.mxu0 0.0
      %404 = vmatpush1.xpose.msra.mxu0 0.0
      %405 = vmatprep.subr.mxu0 0.0
      %406 = vmatpush1.xpose.msra.mxu0 0.0
      %407 = vmatprep.subr.mxu0 0.0
      %408 = vmatpush1.xpose.msra.mxu0 0.0
      %409 = vmatprep.subr.mxu0 0.0
      %410 = vmatpush1.xpose.msra.mxu0 0.0
      %411 = vmatprep.subr.mxu0 0.0
      %412 = vmatpush1.xpose.msra.mxu0 0.0
      %413 = vmatprep.subr.mxu0 0.0
      %414 = vmatpush1.xpose.msra.mxu0 0.0
      %415 = vmatprep.subr.mxu0 0.0
      %416 = vmatpush1.xpose.msra.mxu0 0.0
      %417 = vmatprep.subr.mxu0 0.0
      %418 = vmatpush1.xpose.msra.mxu0 0.0
      %419 = vmatprep.subr.mxu0 0.0
      %420 = vmatpush1.xpose.msra.mxu0 0.0
      %421 = vmatprep.subr.mxu0 0.0
      %422 = vmatpush1.xpose.msra.mxu0 0.0
      %423 = vmatprep.subr.mxu0 0.0
      %424 = vmatpush1.xpose.msra.mxu0 0.0
      %425 = vmatprep.subr.mxu0 0.0
      %426 = vmatpush1.xpose.msra.mxu0 0.0
      %427 = vmatprep.subr.mxu0 0.0
      %428 = vmatpush1.xpose.msra.mxu0 0.0
      %429 = vmatprep.mubr.f32.mxu0 0.0
      %v430 = vand.u32 %v214, 4294901760
      %431 = vmatmul.mubr.f32.gmra.mrb[0].mxu0 %v430
      %v432 = vpop.f32.mrb[0].mxu0
      %v433 = vadd.f32 %v322, %v432
      %v434 = vpop.f32.mrb[0].mxu0
      %435 = vdwg.mxu0
      %436 = vmatprep.subr.mxu0 0.0
      %v437 = vand.u32 %v204, 4294901760
      %v438 = vsub.f32 %v204, %v437
      %439 = vmatpush1.xpose.msra.mxu0 %v438
      %440 = vmatprep.subr.mxu0 0.0
      %v441 = vand.u32 %v205, 4294901760
      %v442 = vsub.f32 %v205, %v441
      %443 = vmatpush1.xpose.msra.mxu0 %v442
      %444 = vmatprep.subr.mxu0 0.0
      %v445 = vand.u32 %v206, 4294901760
      %v446 = vsub.f32 %v206, %v445
      %447 = vmatpush1.xpose.msra.mxu0 %v446
      %448 = vmatprep.subr.mxu0 0.0
      %v449 = vand.u32 %v207, 4294901760
      %v450 = vsub.f32 %v207, %v449
      %451 = vmatpush1.xpose.msra.mxu0 %v450
      %452 = vmatprep.subr.mxu0 0.0
      %v453 = vand.u32 %v208, 4294901760
      %v454 = vsub.f32 %v208, %v453
      %455 = vmatpush1.xpose.msra.mxu0 %v454
      %456 = vmatprep.subr.mxu0 0.0
      %v457 = vand.u32 %v209, 4294901760
      %v458 = vsub.f32 %v209, %v457
      %459 = vmatpush1.xpose.msra.mxu0 %v458
      %460 = vmatprep.subr.mxu0 0.0
      %v461 = vand.u32 %v210, 4294901760
      %v462 = vsub.f32 %v210, %v461
      %463 = vmatpush1.xpose.msra.mxu0 %v462
      %464 = vmatprep.subr.mxu0 0.0
      %v465 = vand.u32 %v211, 4294901760
      %v466 = vsub.f32 %v211, %v465
      %467 = vmatpush1.xpose.msra.mxu0 %v466
      %468 = vmatprep.subr.mxu0 0.0
      %469 = vmatpush1.xpose.msra.mxu0 0.0
      %470 = vmatprep.subr.mxu0 0.0
      %471 = vmatpush1.xpose.msra.mxu0 0.0
      %472 = vmatprep.subr.mxu0 0.0
      %473 = vmatpush1.xpose.msra.mxu0 0.0
      %474 = vmatprep.subr.mxu0 0.0
      %475 = vmatpush1.xpose.msra.mxu0 0.0
      %476 = vmatprep.subr.mxu0 0.0
      %477 = vmatpush1.xpose.msra.mxu0 0.0
      %478 = vmatprep.subr.mxu0 0.0
      %479 = vmatpush1.xpose.msra.mxu0 0.0
      %480 = vmatprep.subr.mxu0 0.0
      %481 = vmatpush1.xpose.msra.mxu0 0.0
      %482 = vmatprep.subr.mxu0 0.0
      %483 = vmatpush1.xpose.msra.mxu0 0.0
      %484 = vmatprep.subr.mxu0 0.0
      %485 = vmatpush1.xpose.msra.mxu0 0.0
      %486 = vmatprep.subr.mxu0 0.0
      %487 = vmatpush1.xpose.msra.mxu0 0.0
      %488 = vmatprep.subr.mxu0 0.0
      %489 = vmatpush1.xpose.msra.mxu0 0.0
      %490 = vmatprep.subr.mxu0 0.0
      %491 = vmatpush1.xpose.msra.mxu0 0.0
      %492 = vmatprep.subr.mxu0 0.0
      %493 = vmatpush1.xpose.msra.mxu0 0.0
      %494 = vmatprep.subr.mxu0 0.0
      %495 = vmatpush1.xpose.msra.mxu0 0.0
      %496 = vmatprep.subr.mxu0 0.0
      %497 = vmatpush1.xpose.msra.mxu0 0.0
      %498 = vmatprep.subr.mxu0 0.0
      %499 = vmatpush1.xpose.msra.mxu0 0.0
      %500 = vmatprep.subr.mxu0 0.0
      %501 = vmatpush1.xpose.msra.mxu0 0.0
      %502 = vmatprep.subr.mxu0 0.0
      %503 = vmatpush1.xpose.msra.mxu0 0.0
      %504 = vmatprep.subr.mxu0 0.0
      %505 = vmatpush1.xpose.msra.mxu0 0.0
      %506 = vmatprep.subr.mxu0 0.0
      %507 = vmatpush1.xpose.msra.mxu0 0.0
      %508 = vmatprep.subr.mxu0 0.0
      %509 = vmatpush1.xpose.msra.mxu0 0.0
      %510 = vmatprep.subr.mxu0 0.0
      %511 = vmatpush1.xpose.msra.mxu0 0.0
      %512 = vmatprep.subr.mxu0 0.0
      %513 = vmatpush1.xpose.msra.mxu0 0.0
      %514 = vmatprep.subr.mxu0 0.0
      %515 = vmatpush1.xpose.msra.mxu0 0.0
      %516 = vmatprep.mubr.f32.mxu0 0.0
      %v517 = vand.u32 %v214, 4294901760
      %v518 = vsub.f32 %v214, %v517
      %519 = vmatmul.mubr.f32.gmra.mrb[0].mxu0 %v518
      %v520 = vpop.f32.mrb[0].mxu0
      %v521 = vadd.f32 %v433, %v520
      %v522 = vpop.f32.mrb[0].mxu0
      %523 = vdwg.mxu0
      %524 = vmatprep.subr.mxu0 0.0
      %v525 = vand.u32 %v204, 4294901760
      %526 = vmatpush1.xpose.msra.mxu0 %v525
      %527 = vmatprep.subr.mxu0 0.0
      %v528 = vand.u32 %v205, 4294901760
      %529 = vmatpush1.xpose.msra.mxu0 %v528
      %530 = vmatprep.subr.mxu0 0.0
      %v531 = vand.u32 %v206, 4294901760
      %532 = vmatpush1.xpose.msra.mxu0 %v531
      %533 = vmatprep.subr.mxu0 0.0
      %v534 = vand.u32 %v207, 4294901760
      %535 = vmatpush1.xpose.msra.mxu0 %v534
      %536 = vmatprep.subr.mxu0 0.0
      %v537 = vand.u32 %v208, 4294901760
      %538 = vmatpush1.xpose.msra.mxu0 %v537
      %539 = vmatprep.subr.mxu0 0.0
      %v540 = vand.u32 %v209, 4294901760
      %541 = vmatpush1.xpose.msra.mxu0 %v540
      %542 = vmatprep.subr.mxu0 0.0
      %v543 = vand.u32 %v210, 4294901760
      %544 = vmatpush1.xpose.msra.mxu0 %v543
      %545 = vmatprep.subr.mxu0 0.0
      %v546 = vand.u32 %v211, 4294901760
      %547 = vmatpush1.xpose.msra.mxu0 %v546
      %548 = vmatprep.subr.mxu0 0.0
      %549 = vmatpush1.xpose.msra.mxu0 0.0
      %550 = vmatprep.subr.mxu0 0.0
      %551 = vmatpush1.xpose.msra.mxu0 0.0
      %552 = vmatprep.subr.mxu0 0.0
      %553 = vmatpush1.xpose.msra.mxu0 0.0
      %554 = vmatprep.subr.mxu0 0.0
      %555 = vmatpush1.xpose.msra.mxu0 0.0
      %556 = vmatprep.subr.mxu0 0.0
      %557 = vmatpush1.xpose.msra.mxu0 0.0
      %558 = vmatprep.subr.mxu0 0.0
      %559 = vmatpush1.xpose.msra.mxu0 0.0
      %560 = vmatprep.subr.mxu0 0.0
      %561 = vmatpush1.xpose.msra.mxu0 0.0
      %562 = vmatprep.subr.mxu0 0.0
      %563 = vmatpush1.xpose.msra.mxu0 0.0
      %564 = vmatprep.subr.mxu0 0.0
      %565 = vmatpush1.xpose.msra.mxu0 0.0
      %566 = vmatprep.subr.mxu0 0.0
      %567 = vmatpush1.xpose.msra.mxu0 0.0
      %568 = vmatprep.subr.mxu0 0.0
      %569 = vmatpush1.xpose.msra.mxu0 0.0
      %570 = vmatprep.subr.mxu0 0.0
      %571 = vmatpush1.xpose.msra.mxu0 0.0
      %572 = vmatprep.subr.mxu0 0.0
      %573 = vmatpush1.xpose.msra.mxu0 0.0
      %574 = vmatprep.subr.mxu0 0.0
      %575 = vmatpush1.xpose.msra.mxu0 0.0
      %576 = vmatprep.subr.mxu0 0.0
      %577 = vmatpush1.xpose.msra.mxu0 0.0
      %578 = vmatprep.subr.mxu0 0.0
      %579 = vmatpush1.xpose.msra.mxu0 0.0
      %580 = vmatprep.subr.mxu0 0.0
      %581 = vmatpush1.xpose.msra.mxu0 0.0
      %582 = vmatprep.subr.mxu0 0.0
      %583 = vmatpush1.xpose.msra.mxu0 0.0
      %584 = vmatprep.subr.mxu0 0.0
      %585 = vmatpush1.xpose.msra.mxu0 0.0
      %586 = vmatprep.subr.mxu0 0.0
      %587 = vmatpush1.xpose.msra.mxu0 0.0
      %588 = vmatprep.subr.mxu0 0.0
      %589 = vmatpush1.xpose.msra.mxu0 0.0
      %590 = vmatprep.subr.mxu0 0.0
      %591 = vmatpush1.xpose.msra.mxu0 0.0
      %592 = vmatprep.subr.mxu0 0.0
      %593 = vmatpush1.xpose.msra.mxu0 0.0
      %594 = vmatprep.subr.mxu0 0.0
      %595 = vmatpush1.xpose.msra.mxu0 0.0
      %596 = vmatprep.mubr.f32.mxu0 0.0
      %v597 = vand.u32 %v214, 4294901760
      %v598 = vsub.f32 %v214, %v597
      %v599 = vand.u32 %v598, 4294901760
      %600 = vmatmul.mubr.f32.gmra.mrb[0].mxu0 %v599
      %v601 = vpop.f32.mrb[0].mxu0
      %v602 = vadd.f32 %v521, %v601
      %v603 = vpop.f32.mrb[0].mxu0
      %604 = vdwg.mxu0
      %605 = vmatprep.subr.mxu0 0.0
      %v606 = vand.u32 %v204, 4294901760
      %v607 = vsub.f32 %v204, %v606
      %v608 = vand.u32 %v607, 4294901760
      %609 = vmatpush1.xpose.msra.mxu0 %v608
      %610 = vmatprep.subr.mxu0 0.0
      %v611 = vand.u32 %v205, 4294901760
      %v612 = vsub.f32 %v205, %v611
      %v613 = vand.u32 %v612, 4294901760
      %614 = vmatpush1.xpose.msra.mxu0 %v613
      %615 = vmatprep.subr.mxu0 0.0
      %v616 = vand.u32 %v206, 4294901760
      %v617 = vsub.f32 %v206, %v616
      %v618 = vand.u32 %v617, 4294901760
      %619 = vmatpush1.xpose.msra.mxu0 %v618
      %620 = vmatprep.subr.mxu0 0.0
      %v621 = vand.u32 %v207, 4294901760
      %v622 = vsub.f32 %v207, %v621
      %v623 = vand.u32 %v622, 4294901760
      %624 = vmatpush1.xpose.msra.mxu0 %v623
      %625 = vmatprep.subr.mxu0 0.0
      %v626 = vand.u32 %v208, 4294901760
      %v627 = vsub.f32 %v208, %v626
      %v628 = vand.u32 %v627, 4294901760
      %629 = vmatpush1.xpose.msra.mxu0 %v628
      %630 = vmatprep.subr.mxu0 0.0
      %v631 = vand.u32 %v209, 4294901760
      %v632 = vsub.f32 %v209, %v631
      %v633 = vand.u32 %v632, 4294901760
      %634 = vmatpush1.xpose.msra.mxu0 %v633
      %635 = vmatprep.subr.mxu0 0.0
      %v636 = vand.u32 %v210, 4294901760
      %v637 = vsub.f32 %v210, %v636
      %v638 = vand.u32 %v637, 4294901760
      %639 = vmatpush1.xpose.msra.mxu0 %v638
      %640 = vmatprep.subr.mxu0 0.0
      %v641 = vand.u32 %v211, 4294901760
      %v642 = vsub.f32 %v211, %v641
      %v643 = vand.u32 %v642, 4294901760
      %644 = vmatpush1.xpose.msra.mxu0 %v643
      %645 = vmatprep.subr.mxu0 0.0
      %646 = vmatpush1.xpose.msra.mxu0 0.0
      %647 = vmatprep.subr.mxu0 0.0
      %648 = vmatpush1.xpose.msra.mxu0 0.0
      %649 = vmatprep.subr.mxu0 0.0
      %650 = vmatpush1.xpose.msra.mxu0 0.0
      %651 = vmatprep.subr.mxu0 0.0
      %652 = vmatpush1.xpose.msra.mxu0 0.0
      %653 = vmatprep.subr.mxu0 0.0
      %654 = vmatpush1.xpose.msra.mxu0 0.0
      %655 = vmatprep.subr.mxu0 0.0
      %656 = vmatpush1.xpose.msra.mxu0 0.0
      %657 = vmatprep.subr.mxu0 0.0
      %658 = vmatpush1.xpose.msra.mxu0 0.0
      %659 = vmatprep.subr.mxu0 0.0
      %660 = vmatpush1.xpose.msra.mxu0 0.0
      %661 = vmatprep.subr.mxu0 0.0
      %662 = vmatpush1.xpose.msra.mxu0 0.0
      %663 = vmatprep.subr.mxu0 0.0
      %664 = vmatpush1.xpose.msra.mxu0 0.0
      %665 = vmatprep.subr.mxu0 0.0
      %666 = vmatpush1.xpose.msra.mxu0 0.0
      %667 = vmatprep.subr.mxu0 0.0
      %668 = vmatpush1.xpose.msra.mxu0 0.0
      %669 = vmatprep.subr.mxu0 0.0
      %670 = vmatpush1.xpose.msra.mxu0 0.0
      %671 = vmatprep.subr.mxu0 0.0
      %672 = vmatpush1.xpose.msra.mxu0 0.0
      %673 = vmatprep.subr.mxu0 0.0
      %674 = vmatpush1.xpose.msra.mxu0 0.0
      %675 = vmatprep.subr.mxu0 0.0
      %676 = vmatpush1.xpose.msra.mxu0 0.0
      %677 = vmatprep.subr.mxu0 0.0
      %678 = vmatpush1.xpose.msra.mxu0 0.0
      %679 = vmatprep.subr.mxu0 0.0
      %680 = vmatpush1.xpose.msra.mxu0 0.0
      %681 = vmatprep.subr.mxu0 0.0
      %682 = vmatpush1.xpose.msra.mxu0 0.0
      %683 = vmatprep.subr.mxu0 0.0
      %684 = vmatpush1.xpose.msra.mxu0 0.0
      %685 = vmatprep.subr.mxu0 0.0
      %686 = vmatpush1.xpose.msra.mxu0 0.0
      %687 = vmatprep.subr.mxu0 0.0
      %688 = vmatpush1.xpose.msra.mxu0 0.0
      %689 = vmatprep.subr.mxu0 0.0
      %690 = vmatpush1.xpose.msra.mxu0 0.0
      %691 = vmatprep.subr.mxu0 0.0
      %692 = vmatpush1.xpose.msra.mxu0 0.0
      %693 = vmatprep.mubr.f32.mxu0 0.0
      %v694 = vand.u32 %v214, 4294901760
      %695 = vmatmul.mubr.f32.gmra.mrb[0].mxu0 %v694
      %v696 = vpop.f32.mrb[0].mxu0
      %v697 = vadd.f32 %v602, %v696
      %v698 = vpop.f32.mrb[0].mxu0
      %699 = vdwg.mxu0
      %700 = vmatprep.subr.mxu0 0.0
      %v701 = vand.u32 %v204, 4294901760
      %702 = vmatpush1.xpose.msra.mxu0 %v701
      %703 = vmatprep.subr.mxu0 0.0
      %v704 = vand.u32 %v205, 4294901760
      %705 = vmatpush1.xpose.msra.mxu0 %v704
      %706 = vmatprep.subr.mxu0 0.0
      %v707 = vand.u32 %v206, 4294901760
      %708 = vmatpush1.xpose.msra.mxu0 %v707
      %709 = vmatprep.subr.mxu0 0.0
      %v710 = vand.u32 %v207, 4294901760
      %711 = vmatpush1.xpose.msra.mxu0 %v710
      %712 = vmatprep.subr.mxu0 0.0
      %v713 = vand.u32 %v208, 4294901760
      %714 = vmatpush1.xpose.msra.mxu0 %v713
      %715 = vmatprep.subr.mxu0 0.0
      %v716 = vand.u32 %v209, 4294901760
      %717 = vmatpush1.xpose.msra.mxu0 %v716
      %718 = vmatprep.subr.mxu0 0.0
      %v719 = vand.u32 %v210, 4294901760
      %720 = vmatpush1.xpose.msra.mxu0 %v719
      %721 = vmatprep.subr.mxu0 0.0
      %v722 = vand.u32 %v211, 4294901760
      %723 = vmatpush1.xpose.msra.mxu0 %v722
      %724 = vmatprep.subr.mxu0 0.0
      %725 = vmatpush1.xpose.msra.mxu0 0.0
      %726 = vmatprep.subr.mxu0 0.0
      %727 = vmatpush1.xpose.msra.mxu0 0.0
      %728 = vmatprep.subr.mxu0 0.0
      %729 = vmatpush1.xpose.msra.mxu0 0.0
      %730 = vmatprep.subr.mxu0 0.0
      %731 = vmatpush1.xpose.msra.mxu0 0.0
      %732 = vmatprep.subr.mxu0 0.0
      %733 = vmatpush1.xpose.msra.mxu0 0.0
      %734 = vmatprep.subr.mxu0 0.0
      %735 = vmatpush1.xpose.msra.mxu0 0.0
      %736 = vmatprep.subr.mxu0 0.0
      %737 = vmatpush1.xpose.msra.mxu0 0.0
      %738 = vmatprep.subr.mxu0 0.0
      %739 = vmatpush1.xpose.msra.mxu0 0.0
      %740 = vmatprep.subr.mxu0 0.0
      %741 = vmatpush1.xpose.msra.mxu0 0.0
      %742 = vmatprep.subr.mxu0 0.0
      %743 = vmatpush1.xpose.msra.mxu0 0.0
      %744 = vmatprep.subr.mxu0 0.0
      %745 = vmatpush1.xpose.msra.mxu0 0.0
      %746 = vmatprep.subr.mxu0 0.0
      %747 = vmatpush1.xpose.msra.mxu0 0.0
      %748 = vmatprep.subr.mxu0 0.0
      %749 = vmatpush1.xpose.msra.mxu0 0.0
      %750 = vmatprep.subr.mxu0 0.0
      %751 = vmatpush1.xpose.msra.mxu0 0.0
      %752 = vmatprep.subr.mxu0 0.0
      %753 = vmatpush1.xpose.msra.mxu0 0.0
      %754 = vmatprep.subr.mxu0 0.0
      %755 = vmatpush1.xpose.msra.mxu0 0.0
      %756 = vmatprep.subr.mxu0 0.0
      %757 = vmatpush1.xpose.msra.mxu0 0.0
      %758 = vmatprep.subr.mxu0 0.0
      %759 = vmatpush1.xpose.msra.mxu0 0.0
      %760 = vmatprep.subr.mxu0 0.0
      %761 = vmatpush1.xpose.msra.mxu0 0.0
      %762 = vmatprep.subr.mxu0 0.0
      %763 = vmatpush1.xpose.msra.mxu0 0.0
      %764 = vmatprep.subr.mxu0 0.0
      %765 = vmatpush1.xpose.msra.mxu0 0.0
      %766 = vmatprep.subr.mxu0 0.0
      %767 = vmatpush1.xpose.msra.mxu0 0.0
      %768 = vmatprep.subr.mxu0 0.0
      %769 = vmatpush1.xpose.msra.mxu0 0.0
      %770 = vmatprep.subr.mxu0 0.0
      %771 = vmatpush1.xpose.msra.mxu0 0.0
      %772 = vmatprep.mubr.f32.mxu0 0.0
      %v773 = vand.u32 %v214, 4294901760
      %774 = vmatmul.mubr.f32.gmra.mrb[0].mxu0 %v773
      %v775 = vpop.f32.mrb[0].mxu0
      %v776 = vadd.f32 %v697, %v775
      %v777 = vpop.f32.mrb[0].mxu0
      %778 = vdwg.mxu0
      %v787 = vlaneseq
      %v788 = vand.u32 %v787, 127
      %v789 = vlaneseq
      %v790 = vshrl.u32 %v789, 7
      %v791 = vsub.s32 %v788, %v790
      %v792 = vrot.slane %v224, %v791
      %v793 = vadd.s32 %v788, 4294967288
      %v794 = vlaneseq
      %v795 = vshrl.u32 %v794, 7
      %v796 = vsub.s32 %v793, %v795
      %v797 = vrot.slane %v226, %v796
      %vm798 = vcmask 130112
      %v799 = vsel %vm798, %v797, %v792
      %v800 = vadd.s32 %v788, 4294967280
      %v801 = vlaneseq
      %v802 = vshrl.u32 %v801, 7
      %v803 = vsub.s32 %v800, %v802
      %v804 = vrot.slane %v228, %v803
      %vm805 = vcmask 195712
      %v806 = vsel %vm805, %v804, %v799
      %v807 = vadd.s32 %v788, 4294967272
      %v808 = vlaneseq
      %v809 = vshrl.u32 %v808, 7
      %v810 = vsub.s32 %v807, %v809
      %v811 = vrot.slane %v230, %v810
      %vm812 = vcmask 261312
      %v813 = vsel %vm812, %v811, %v806
      %v814 = vadd.s32 %v788, 4294967264
      %v815 = vlaneseq
      %v816 = vshrl.u32 %v815, 7
      %v817 = vsub.s32 %v814, %v816
      %v818 = vrot.slane %v232, %v817
      %vm819 = vcmask 326912
      %v820 = vsel %vm819, %v818, %v813
      %v821 = vadd.s32 %v788, 4294967256
      %v822 = vlaneseq
      %v823 = vshrl.u32 %v822, 7
      %v824 = vsub.s32 %v821, %v823
      %v825 = vrot.slane %v234, %v824
      %vm826 = vcmask 392512
      %v827 = vsel %vm826, %v825, %v820
      %v828 = vadd.s32 %v788, 4294967248
      %v829 = vlaneseq
      %v830 = vshrl.u32 %v829, 7
      %v831 = vsub.s32 %v828, %v830
      %v832 = vrot.slane %v236, %v831
      %vm833 = vcmask 458112
      %v834 = vsel %vm833, %v832, %v827
      %v835 = vadd.s32 %v788, 4294967240
      %v836 = vlaneseq
      %v837 = vshrl.u32 %v836, 7
      %v838 = vsub.s32 %v835, %v837
      %v839 = vrot.slane %v238, %v838
      %vm840 = vcmask 523712
      %v841 = vsel %vm840, %v839, %v834
      %vm842 = vcmask 1042434
      %v843 = vsel %vm842, %v841, %v841
      %vm844 = vcmask 1043459
      %v845 = vsel %vm844, %v841, %v843
      %vm846 = vcmask 1044484
      %v847 = vsel %vm846, %v841, %v845
      %vm848 = vcmask 1045509
      %v849 = vsel %vm848, %v841, %v847
      %vm850 = vcmask 1046534
      %v851 = vsel %vm850, %v841, %v849
      %vm852 = vcmask 1047559
      %v853 = vsel %vm852, %v841, %v851
      %v855 = vadd.f32 %v241, %v853
      %v856 = vmul.f32 %v776, 2.0
      %v857 = vsub.f32 %v855, %v856
      %v858 = vmax.f32 %v857, 1e-12
      %v859 = vld [vmem:[%s195] sm:$0xff]
      %v860 = vld [vmem:[%s2] sm:$0x1]
      %861 = vset.pattern.permute.xlu0 0
      %862 = vperm.xlu0 %861, %v859
      %v863 = vpop.permute.xlu0 %862
      %v864 = vlaneseq
      %v865 = vshrl.u32 %v864, 7
      %v866 = vsub.s32 0, %v865
      %v867 = vrot.slane %v860, %v866
      %vm868 = vcmp.eq.s32.totalorder %v863, %v867
      %v869 = vlaneseq
      %v870 = vshrl.u32 %v869, 7
      %v871 = vstv %s212
      %v872 = vadd.s32 %v870, %v871
      %vm873 = vcmp.lt.s32.totalorder %v788, 64
      %vm874 = vcmp.lt.s32.totalorder %v872, 64
      %vm875 = vcmp.ne.s32.totalorder %v788, %v872
      %vm876 = vmand %vm868, %vm875
      %vm877 = vcmp.gt.f32.partialorder %v858, 1e-09
      %vm878 = vmand %vm876, %vm877
      %vm879 = vmand %vm878, %vm873
      %vm880 = vmand %vm879, %vm874
      %vm881 = vmxor %vm868, 1
      %vm882 = vmand %vm881, %vm873
      %vm883 = vmand %vm882, %vm874
      %v884 = vadd.f32 %v858, 200.0
      %v885 = vsel %vm880, %v884, -1e+30
      %v886 = vsel %vm883, %v858, 1e+30
      %v887 = vsel %vm880, 1, 0
      %v888 = vcvt.s32.f32 %v887
      %vm889 = vcmask 523264
      %v890 = vsel %vm889, %v888, 0.0
      %891 = vadd.xlane.f32.xlu0 %v890
      %v892 = vpop.xlane.xlu0 %891
      %893 = vst [vmem:[%s203] sm:$0xff] %v892
      %v894 = vlaneseq
      %v895 = vshrl.u32 %v894, 7
      %v896 = vsub.s32 0, %v895
      %v897 = vrot.slane %v885, %v896
      %899 = vbcast.lane.b32.xlu0 %v897, 256
      %v900 = vpop.permute.xlu0 %899
      %s902 = sor.u32 256, 8
      %903 = vbcast.lane.b32.xlu0 %v897, %s902
      %v904 = vpop.permute.xlu0 %903
      %s906 = sor.u32 256, 16
      %907 = vbcast.lane.b32.xlu0 %v897, %s906
      %v908 = vpop.permute.xlu0 %907
      %s910 = sor.u32 256, 24
      %911 = vbcast.lane.b32.xlu0 %v897, %s910
      %v912 = vpop.permute.xlu0 %911
      %s914 = sor.u32 256, 32
      %915 = vbcast.lane.b32.xlu0 %v897, %s914
      %v916 = vpop.permute.xlu0 %915
      %s918 = sor.u32 256, 40
      %919 = vbcast.lane.b32.xlu0 %v897, %s918
      %v920 = vpop.permute.xlu0 %919
      %s922 = sor.u32 256, 48
      %923 = vbcast.lane.b32.xlu0 %v897, %s922
      %v924 = vpop.permute.xlu0 %923
      %s926 = sor.u32 256, 56
      %927 = vbcast.lane.b32.xlu0 %v897, %s926
      %v928 = vpop.permute.xlu0 %927
      %v929 = vlaneseq
      %v930 = vshrl.u32 %v929, 7
      %v931 = vsub.s32 0, %v930
      %v932 = vrot.slane %v886, %v931
      %v933 = vsub.f32 %v900, %v932
      %v934 = vsub.f32 %v904, %v932
      %v935 = vsub.f32 %v908, %v932
      %v936 = vsub.f32 %v912, %v932
      %v937 = vsub.f32 %v916, %v932
      %v938 = vsub.f32 %v920, %v932
      %v939 = vsub.f32 %v924, %v932
      %v940 = vsub.f32 %v928, %v932
      %v941 = vmax.f32 %v933, 0.0
      %v942 = vmax.f32 %v934, 0.0
      %v943 = vmax.f32 %v935, 0.0
      %v944 = vmax.f32 %v936, 0.0
      %v945 = vmax.f32 %v937, 0.0
      %v946 = vmax.f32 %v938, 0.0
      %v947 = vmax.f32 %v939, 0.0
      %v948 = vmax.f32 %v940, 0.0
      %v949 = vsel %vm889, %v941, 0.0
      %v950 = vsel %vm889, %v942, 0.0
      %v951 = vadd.f32 %v949, %v950
      %v952 = vsel %vm889, %v943, 0.0
      %v953 = vadd.f32 %v951, %v952
      %v954 = vsel %vm889, %v944, 0.0
      %v955 = vadd.f32 %v953, %v954
      %v956 = vsel %vm889, %v945, 0.0
      %v957 = vadd.f32 %v955, %v956
      %v958 = vsel %vm889, %v946, 0.0
      %v959 = vadd.f32 %v957, %v958
      %v960 = vsel %vm889, %v947, 0.0
      %v961 = vadd.f32 %v959, %v960
      %v962 = vsel %vm889, %v948, 0.0
      %v963 = vadd.f32 %v961, %v962
      %964 = vadd.xlane.f32.xlu0 %v963
      %v965 = vpop.xlane.xlu0 %964
      %v966 = vrot.slane %v965, 4
      %v967 = vadd.f32 %v965, %v966
      %v968 = vrot.slane %v967, 2
      %v969 = vadd.f32 %v967, %v968
      %v970 = vrot.slane %v969, 1
      %v971 = vadd.f32 %v969, %v970
      %s972 = vtos %v971
      %v973 = vstv %s972
      %v974 = vlaneseq
      %v975 = vshrl.u32 %v974, 7
      %v976 = vsub.s32 1, %v975
      %v977 = vrot.slane %v885, %v976
      %979 = vbcast.lane.b32.xlu0 %v977, 256
      %v980 = vpop.permute.xlu0 %979
      %s982 = sor.u32 256, 8
      %983 = vbcast.lane.b32.xlu0 %v977, %s982
      %v984 = vpop.permute.xlu0 %983
      %s986 = sor.u32 256, 16
      %987 = vbcast.lane.b32.xlu0 %v977, %s986
      %v988 = vpop.permute.xlu0 %987
      %s990 = sor.u32 256, 24
      %991 = vbcast.lane.b32.xlu0 %v977, %s990
      %v992 = vpop.permute.xlu0 %991
      %s994 = sor.u32 256, 32
      %995 = vbcast.lane.b32.xlu0 %v977, %s994
      %v996 = vpop.permute.xlu0 %995
      %s998 = sor.u32 256, 40
      %999 = vbcast.lane.b32.xlu0 %v977, %s998
      %v1000 = vpop.permute.xlu0 %999
      %s1002 = sor.u32 256, 48
      %1003 = vbcast.lane.b32.xlu0 %v977, %s1002
      %v1004 = vpop.permute.xlu0 %1003
      %s1006 = sor.u32 256, 56
      %1007 = vbcast.lane.b32.xlu0 %v977, %s1006
      %v1008 = vpop.permute.xlu0 %1007
      %v1009 = vlaneseq
      %v1010 = vshrl.u32 %v1009, 7
      %v1011 = vsub.s32 1, %v1010
      %v1012 = vrot.slane %v886, %v1011
      %v1013 = vsub.f32 %v980, %v1012
      %v1014 = vsub.f32 %v984, %v1012
      %v1015 = vsub.f32 %v988, %v1012
      %v1016 = vsub.f32 %v992, %v1012
      %v1017 = vsub.f32 %v996, %v1012
      %v1018 = vsub.f32 %v1000, %v1012
      %v1019 = vsub.f32 %v1004, %v1012
      %v1020 = vsub.f32 %v1008, %v1012
      %v1021 = vmax.f32 %v1013, 0.0
      %v1022 = vmax.f32 %v1014, 0.0
      %v1023 = vmax.f32 %v1015, 0.0
      %v1024 = vmax.f32 %v1016, 0.0
      %v1025 = vmax.f32 %v1017, 0.0
      %v1026 = vmax.f32 %v1018, 0.0
      %v1027 = vmax.f32 %v1019, 0.0
      %v1028 = vmax.f32 %v1020, 0.0
      %v1029 = vsel %vm889, %v1021, 0.0
      %v1030 = vsel %vm889, %v1022, 0.0
      %v1031 = vadd.f32 %v1029, %v1030
      %v1032 = vsel %vm889, %v1023, 0.0
      %v1033 = vadd.f32 %v1031, %v1032
      %v1034 = vsel %vm889, %v1024, 0.0
      %v1035 = vadd.f32 %v1033, %v1034
      %v1036 = vsel %vm889, %v1025, 0.0
      %v1037 = vadd.f32 %v1035, %v1036
      %v1038 = vsel %vm889, %v1026, 0.0
      %v1039 = vadd.f32 %v1037, %v1038
      %v1040 = vsel %vm889, %v1027, 0.0
      %v1041 = vadd.f32 %v1039, %v1040
      %v1042 = vsel %vm889, %v1028, 0.0
      %v1043 = vadd.f32 %v1041, %v1042
      %1044 = vadd.xlane.f32.xlu0 %v1043
      %v1045 = vpop.xlane.xlu0 %1044
      %v1046 = vrot.slane %v1045, 4
      %v1047 = vadd.f32 %v1045, %v1046
      %v1048 = vrot.slane %v1047, 2
      %v1049 = vadd.f32 %v1047, %v1048
      %v1050 = vrot.slane %v1049, 1
      %v1051 = vadd.f32 %v1049, %v1050
      %s1052 = vtos %v1051
      %v1053 = vstv %s1052
      %v1054 = vlaneseq
      %v1055 = vshrl.u32 %v1054, 7
      %v1056 = vsub.s32 2, %v1055
      %v1057 = vrot.slane %v885, %v1056
      %1059 = vbcast.lane.b32.xlu0 %v1057, 256
      %v1060 = vpop.permute.xlu0 %1059
      %s1062 = sor.u32 256, 8
      %1063 = vbcast.lane.b32.xlu0 %v1057, %s1062
      %v1064 = vpop.permute.xlu0 %1063
      %s1066 = sor.u32 256, 16
      %1067 = vbcast.lane.b32.xlu0 %v1057, %s1066
      %v1068 = vpop.permute.xlu0 %1067
      %s1070 = sor.u32 256, 24
      %1071 = vbcast.lane.b32.xlu0 %v1057, %s1070
      %v1072 = vpop.permute.xlu0 %1071
      %s1074 = sor.u32 256, 32
      %1075 = vbcast.lane.b32.xlu0 %v1057, %s1074
      %v1076 = vpop.permute.xlu0 %1075
      %s1078 = sor.u32 256, 40
      %1079 = vbcast.lane.b32.xlu0 %v1057, %s1078
      %v1080 = vpop.permute.xlu0 %1079
      %s1082 = sor.u32 256, 48
      %1083 = vbcast.lane.b32.xlu0 %v1057, %s1082
      %v1084 = vpop.permute.xlu0 %1083
      %s1086 = sor.u32 256, 56
      %1087 = vbcast.lane.b32.xlu0 %v1057, %s1086
      %v1088 = vpop.permute.xlu0 %1087
      %v1089 = vlaneseq
      %v1090 = vshrl.u32 %v1089, 7
      %v1091 = vsub.s32 2, %v1090
      %v1092 = vrot.slane %v886, %v1091
      %v1093 = vsub.f32 %v1060, %v1092
      %v1094 = vsub.f32 %v1064, %v1092
      %v1095 = vsub.f32 %v1068, %v1092
      %v1096 = vsub.f32 %v1072, %v1092
      %v1097 = vsub.f32 %v1076, %v1092
      %v1098 = vsub.f32 %v1080, %v1092
      %v1099 = vsub.f32 %v1084, %v1092
      %v1100 = vsub.f32 %v1088, %v1092
      %v1101 = vmax.f32 %v1093, 0.0
      %v1102 = vmax.f32 %v1094, 0.0
      %v1103 = vmax.f32 %v1095, 0.0
      %v1104 = vmax.f32 %v1096, 0.0
      %v1105 = vmax.f32 %v1097, 0.0
      %v1106 = vmax.f32 %v1098, 0.0
      %v1107 = vmax.f32 %v1099, 0.0
      %v1108 = vmax.f32 %v1100, 0.0
      %v1109 = vsel %vm889, %v1101, 0.0
      %v1110 = vsel %vm889, %v1102, 0.0
      %v1111 = vadd.f32 %v1109, %v1110
      %v1112 = vsel %vm889, %v1103, 0.0
      %v1113 = vadd.f32 %v1111, %v1112
      %v1114 = vsel %vm889, %v1104, 0.0
      %v1115 = vadd.f32 %v1113, %v1114
      %v1116 = vsel %vm889, %v1105, 0.0
      %v1117 = vadd.f32 %v1115, %v1116
      %v1118 = vsel %vm889, %v1106, 0.0
      %v1119 = vadd.f32 %v1117, %v1118
      %v1120 = vsel %vm889, %v1107, 0.0
      %v1121 = vadd.f32 %v1119, %v1120
      %v1122 = vsel %vm889, %v1108, 0.0
      %v1123 = vadd.f32 %v1121, %v1122
      %1124 = vadd.xlane.f32.xlu0 %v1123
      %v1125 = vpop.xlane.xlu0 %1124
      %v1126 = vrot.slane %v1125, 4
      %v1127 = vadd.f32 %v1125, %v1126
      %v1128 = vrot.slane %v1127, 2
      %v1129 = vadd.f32 %v1127, %v1128
      %v1130 = vrot.slane %v1129, 1
      %v1131 = vadd.f32 %v1129, %v1130
      %s1132 = vtos %v1131
      %v1133 = vstv %s1132
      %v1134 = vlaneseq
      %v1135 = vshrl.u32 %v1134, 7
      %v1136 = vsub.s32 3, %v1135
      %v1137 = vrot.slane %v885, %v1136
      %1139 = vbcast.lane.b32.xlu0 %v1137, 256
      %v1140 = vpop.permute.xlu0 %1139
      %s1142 = sor.u32 256, 8
      %1143 = vbcast.lane.b32.xlu0 %v1137, %s1142
      %v1144 = vpop.permute.xlu0 %1143
      %s1146 = sor.u32 256, 16
      %1147 = vbcast.lane.b32.xlu0 %v1137, %s1146
      %v1148 = vpop.permute.xlu0 %1147
      %s1150 = sor.u32 256, 24
      %1151 = vbcast.lane.b32.xlu0 %v1137, %s1150
      %v1152 = vpop.permute.xlu0 %1151
      %s1154 = sor.u32 256, 32
      %1155 = vbcast.lane.b32.xlu0 %v1137, %s1154
      %v1156 = vpop.permute.xlu0 %1155
      %s1158 = sor.u32 256, 40
      %1159 = vbcast.lane.b32.xlu0 %v1137, %s1158
      %v1160 = vpop.permute.xlu0 %1159
      %s1162 = sor.u32 256, 48
      %1163 = vbcast.lane.b32.xlu0 %v1137, %s1162
      %v1164 = vpop.permute.xlu0 %1163
      %s1166 = sor.u32 256, 56
      %1167 = vbcast.lane.b32.xlu0 %v1137, %s1166
      %v1168 = vpop.permute.xlu0 %1167
      %v1169 = vlaneseq
      %v1170 = vshrl.u32 %v1169, 7
      %v1171 = vsub.s32 3, %v1170
      %v1172 = vrot.slane %v886, %v1171
      %v1173 = vsub.f32 %v1140, %v1172
      %v1174 = vsub.f32 %v1144, %v1172
      %v1175 = vsub.f32 %v1148, %v1172
      %v1176 = vsub.f32 %v1152, %v1172
      %v1177 = vsub.f32 %v1156, %v1172
      %v1178 = vsub.f32 %v1160, %v1172
      %v1179 = vsub.f32 %v1164, %v1172
      %v1180 = vsub.f32 %v1168, %v1172
      %v1181 = vmax.f32 %v1173, 0.0
      %v1182 = vmax.f32 %v1174, 0.0
      %v1183 = vmax.f32 %v1175, 0.0
      %v1184 = vmax.f32 %v1176, 0.0
      %v1185 = vmax.f32 %v1177, 0.0
      %v1186 = vmax.f32 %v1178, 0.0
      %v1187 = vmax.f32 %v1179, 0.0
      %v1188 = vmax.f32 %v1180, 0.0
      %v1189 = vsel %vm889, %v1181, 0.0
      %v1190 = vsel %vm889, %v1182, 0.0
      %v1191 = vadd.f32 %v1189, %v1190
      %v1192 = vsel %vm889, %v1183, 0.0
      %v1193 = vadd.f32 %v1191, %v1192
      %v1194 = vsel %vm889, %v1184, 0.0
      %v1195 = vadd.f32 %v1193, %v1194
      %v1196 = vsel %vm889, %v1185, 0.0
      %v1197 = vadd.f32 %v1195, %v1196
      %v1198 = vsel %vm889, %v1186, 0.0
      %v1199 = vadd.f32 %v1197, %v1198
      %v1200 = vsel %vm889, %v1187, 0.0
      %v1201 = vadd.f32 %v1199, %v1200
      %v1202 = vsel %vm889, %v1188, 0.0
      %v1203 = vadd.f32 %v1201, %v1202
      %1204 = vadd.xlane.f32.xlu0 %v1203
      %v1205 = vpop.xlane.xlu0 %1204
      %v1206 = vrot.slane %v1205, 4
      %v1207 = vadd.f32 %v1205, %v1206
      %v1208 = vrot.slane %v1207, 2
      %v1209 = vadd.f32 %v1207, %v1208
      %v1210 = vrot.slane %v1209, 1
      %v1211 = vadd.f32 %v1209, %v1210
      %s1212 = vtos %v1211
      %v1213 = vstv %s1212
      %v1214 = vlaneseq
      %v1215 = vshrl.u32 %v1214, 7
      %v1216 = vsub.s32 4, %v1215
      %v1217 = vrot.slane %v885, %v1216
      %1219 = vbcast.lane.b32.xlu0 %v1217, 256
      %v1220 = vpop.permute.xlu0 %1219
      %s1222 = sor.u32 256, 8
      %1223 = vbcast.lane.b32.xlu0 %v1217, %s1222
      %v1224 = vpop.permute.xlu0 %1223
      %s1226 = sor.u32 256, 16
      %1227 = vbcast.lane.b32.xlu0 %v1217, %s1226
      %v1228 = vpop.permute.xlu0 %1227
      %s1230 = sor.u32 256, 24
      %1231 = vbcast.lane.b32.xlu0 %v1217, %s1230
      %v1232 = vpop.permute.xlu0 %1231
      %s1234 = sor.u32 256, 32
      %1235 = vbcast.lane.b32.xlu0 %v1217, %s1234
      %v1236 = vpop.permute.xlu0 %1235
      %s1238 = sor.u32 256, 40
      %1239 = vbcast.lane.b32.xlu0 %v1217, %s1238
      %v1240 = vpop.permute.xlu0 %1239
      %s1242 = sor.u32 256, 48
      %1243 = vbcast.lane.b32.xlu0 %v1217, %s1242
      %v1244 = vpop.permute.xlu0 %1243
      %s1246 = sor.u32 256, 56
      %1247 = vbcast.lane.b32.xlu0 %v1217, %s1246
      %v1248 = vpop.permute.xlu0 %1247
      %v1249 = vlaneseq
      %v1250 = vshrl.u32 %v1249, 7
      %v1251 = vsub.s32 4, %v1250
      %v1252 = vrot.slane %v886, %v1251
      %v1253 = vsub.f32 %v1220, %v1252
      %v1254 = vsub.f32 %v1224, %v1252
      %v1255 = vsub.f32 %v1228, %v1252
      %v1256 = vsub.f32 %v1232, %v1252
      %v1257 = vsub.f32 %v1236, %v1252
      %v1258 = vsub.f32 %v1240, %v1252
      %v1259 = vsub.f32 %v1244, %v1252
      %v1260 = vsub.f32 %v1248, %v1252
      %v1261 = vmax.f32 %v1253, 0.0
      %v1262 = vmax.f32 %v1254, 0.0
      %v1263 = vmax.f32 %v1255, 0.0
      %v1264 = vmax.f32 %v1256, 0.0
      %v1265 = vmax.f32 %v1257, 0.0
      %v1266 = vmax.f32 %v1258, 0.0
      %v1267 = vmax.f32 %v1259, 0.0
      %v1268 = vmax.f32 %v1260, 0.0
      %v1269 = vsel %vm889, %v1261, 0.0
      %v1270 = vsel %vm889, %v1262, 0.0
      %v1271 = vadd.f32 %v1269, %v1270
      %v1272 = vsel %vm889, %v1263, 0.0
      %v1273 = vadd.f32 %v1271, %v1272
      %v1274 = vsel %vm889, %v1264, 0.0
      %v1275 = vadd.f32 %v1273, %v1274
      %v1276 = vsel %vm889, %v1265, 0.0
      %v1277 = vadd.f32 %v1275, %v1276
      %v1278 = vsel %vm889, %v1266, 0.0
      %v1279 = vadd.f32 %v1277, %v1278
      %v1280 = vsel %vm889, %v1267, 0.0
      %v1281 = vadd.f32 %v1279, %v1280
      %v1282 = vsel %vm889, %v1268, 0.0
      %v1283 = vadd.f32 %v1281, %v1282
      %1284 = vadd.xlane.f32.xlu0 %v1283
      %v1285 = vpop.xlane.xlu0 %1284
      %v1286 = vrot.slane %v1285, 4
      %v1287 = vadd.f32 %v1285, %v1286
      %v1288 = vrot.slane %v1287, 2
      %v1289 = vadd.f32 %v1287, %v1288
      %v1290 = vrot.slane %v1289, 1
      %v1291 = vadd.f32 %v1289, %v1290
      %s1292 = vtos %v1291
      %v1293 = vstv %s1292
      %v1294 = vlaneseq
      %v1295 = vshrl.u32 %v1294, 7
      %v1296 = vsub.s32 5, %v1295
      %v1297 = vrot.slane %v885, %v1296
      %1299 = vbcast.lane.b32.xlu0 %v1297, 256
      %v1300 = vpop.permute.xlu0 %1299
      %s1302 = sor.u32 256, 8
      %1303 = vbcast.lane.b32.xlu0 %v1297, %s1302
      %v1304 = vpop.permute.xlu0 %1303
      %s1306 = sor.u32 256, 16
      %1307 = vbcast.lane.b32.xlu0 %v1297, %s1306
      %v1308 = vpop.permute.xlu0 %1307
      %s1310 = sor.u32 256, 24
      %1311 = vbcast.lane.b32.xlu0 %v1297, %s1310
      %v1312 = vpop.permute.xlu0 %1311
      %s1314 = sor.u32 256, 32
      %1315 = vbcast.lane.b32.xlu0 %v1297, %s1314
      %v1316 = vpop.permute.xlu0 %1315
      %s1318 = sor.u32 256, 40
      %1319 = vbcast.lane.b32.xlu0 %v1297, %s1318
      %v1320 = vpop.permute.xlu0 %1319
      %s1322 = sor.u32 256, 48
      %1323 = vbcast.lane.b32.xlu0 %v1297, %s1322
      %v1324 = vpop.permute.xlu0 %1323
      %s1326 = sor.u32 256, 56
      %1327 = vbcast.lane.b32.xlu0 %v1297, %s1326
      %v1328 = vpop.permute.xlu0 %1327
      %v1329 = vlaneseq
      %v1330 = vshrl.u32 %v1329, 7
      %v1331 = vsub.s32 5, %v1330
      %v1332 = vrot.slane %v886, %v1331
      %v1333 = vsub.f32 %v1300, %v1332
      %v1334 = vsub.f32 %v1304, %v1332
      %v1335 = vsub.f32 %v1308, %v1332
      %v1336 = vsub.f32 %v1312, %v1332
      %v1337 = vsub.f32 %v1316, %v1332
      %v1338 = vsub.f32 %v1320, %v1332
      %v1339 = vsub.f32 %v1324, %v1332
      %v1340 = vsub.f32 %v1328, %v1332
      %v1341 = vmax.f32 %v1333, 0.0
      %v1342 = vmax.f32 %v1334, 0.0
      %v1343 = vmax.f32 %v1335, 0.0
      %v1344 = vmax.f32 %v1336, 0.0
      %v1345 = vmax.f32 %v1337, 0.0
      %v1346 = vmax.f32 %v1338, 0.0
      %v1347 = vmax.f32 %v1339, 0.0
      %v1348 = vmax.f32 %v1340, 0.0
      %v1349 = vsel %vm889, %v1341, 0.0
      %v1350 = vsel %vm889, %v1342, 0.0
      %v1351 = vadd.f32 %v1349, %v1350
      %v1352 = vsel %vm889, %v1343, 0.0
      %v1353 = vadd.f32 %v1351, %v1352
      %v1354 = vsel %vm889, %v1344, 0.0
      %v1355 = vadd.f32 %v1353, %v1354
      %v1356 = vsel %vm889, %v1345, 0.0
      %v1357 = vadd.f32 %v1355, %v1356
      %v1358 = vsel %vm889, %v1346, 0.0
      %v1359 = vadd.f32 %v1357, %v1358
      %v1360 = vsel %vm889, %v1347, 0.0
      %v1361 = vadd.f32 %v1359, %v1360
      %v1362 = vsel %vm889, %v1348, 0.0
      %v1363 = vadd.f32 %v1361, %v1362
      %1364 = vadd.xlane.f32.xlu0 %v1363
      %v1365 = vpop.xlane.xlu0 %1364
      %v1366 = vrot.slane %v1365, 4
      %v1367 = vadd.f32 %v1365, %v1366
      %v1368 = vrot.slane %v1367, 2
      %v1369 = vadd.f32 %v1367, %v1368
      %v1370 = vrot.slane %v1369, 1
      %v1371 = vadd.f32 %v1369, %v1370
      %s1372 = vtos %v1371
      %v1373 = vstv %s1372
      %v1374 = vlaneseq
      %v1375 = vshrl.u32 %v1374, 7
      %v1376 = vsub.s32 6, %v1375
      %v1377 = vrot.slane %v885, %v1376
      %1379 = vbcast.lane.b32.xlu0 %v1377, 256
      %v1380 = vpop.permute.xlu0 %1379
      %s1382 = sor.u32 256, 8
      %1383 = vbcast.lane.b32.xlu0 %v1377, %s1382
      %v1384 = vpop.permute.xlu0 %1383
      %s1386 = sor.u32 256, 16
      %1387 = vbcast.lane.b32.xlu0 %v1377, %s1386
      %v1388 = vpop.permute.xlu0 %1387
      %s1390 = sor.u32 256, 24
      %1391 = vbcast.lane.b32.xlu0 %v1377, %s1390
      %v1392 = vpop.permute.xlu0 %1391
      %s1394 = sor.u32 256, 32
      %1395 = vbcast.lane.b32.xlu0 %v1377, %s1394
      %v1396 = vpop.permute.xlu0 %1395
      %s1398 = sor.u32 256, 40
      %1399 = vbcast.lane.b32.xlu0 %v1377, %s1398
      %v1400 = vpop.permute.xlu0 %1399
      %s1402 = sor.u32 256, 48
      %1403 = vbcast.lane.b32.xlu0 %v1377, %s1402
      %v1404 = vpop.permute.xlu0 %1403
      %s1406 = sor.u32 256, 56
      %1407 = vbcast.lane.b32.xlu0 %v1377, %s1406
      %v1408 = vpop.permute.xlu0 %1407
      %v1409 = vlaneseq
      %v1410 = vshrl.u32 %v1409, 7
      %v1411 = vsub.s32 6, %v1410
      %v1412 = vrot.slane %v886, %v1411
      %v1413 = vsub.f32 %v1380, %v1412
      %v1414 = vsub.f32 %v1384, %v1412
      %v1415 = vsub.f32 %v1388, %v1412
      %v1416 = vsub.f32 %v1392, %v1412
      %v1417 = vsub.f32 %v1396, %v1412
      %v1418 = vsub.f32 %v1400, %v1412
      %v1419 = vsub.f32 %v1404, %v1412
      %v1420 = vsub.f32 %v1408, %v1412
      %v1421 = vmax.f32 %v1413, 0.0
      %v1422 = vmax.f32 %v1414, 0.0
      %v1423 = vmax.f32 %v1415, 0.0
      %v1424 = vmax.f32 %v1416, 0.0
      %v1425 = vmax.f32 %v1417, 0.0
      %v1426 = vmax.f32 %v1418, 0.0
      %v1427 = vmax.f32 %v1419, 0.0
      %v1428 = vmax.f32 %v1420, 0.0
      %v1429 = vsel %vm889, %v1421, 0.0
      %v1430 = vsel %vm889, %v1422, 0.0
      %v1431 = vadd.f32 %v1429, %v1430
      %v1432 = vsel %vm889, %v1423, 0.0
      %v1433 = vadd.f32 %v1431, %v1432
      %v1434 = vsel %vm889, %v1424, 0.0
      %v1435 = vadd.f32 %v1433, %v1434
      %v1436 = vsel %vm889, %v1425, 0.0
      %v1437 = vadd.f32 %v1435, %v1436
      %v1438 = vsel %vm889, %v1426, 0.0
      %v1439 = vadd.f32 %v1437, %v1438
      %v1440 = vsel %vm889, %v1427, 0.0
      %v1441 = vadd.f32 %v1439, %v1440
      %v1442 = vsel %vm889, %v1428, 0.0
      %v1443 = vadd.f32 %v1441, %v1442
      %1444 = vadd.xlane.f32.xlu0 %v1443
      %v1445 = vpop.xlane.xlu0 %1444
      %v1446 = vrot.slane %v1445, 4
      %v1447 = vadd.f32 %v1445, %v1446
      %v1448 = vrot.slane %v1447, 2
      %v1449 = vadd.f32 %v1447, %v1448
      %v1450 = vrot.slane %v1449, 1
      %v1451 = vadd.f32 %v1449, %v1450
      %s1452 = vtos %v1451
      %v1453 = vstv %s1452
      %v1454 = vlaneseq
      %v1455 = vshrl.u32 %v1454, 7
      %v1456 = vsub.s32 7, %v1455
      %v1457 = vrot.slane %v885, %v1456
      %1459 = vbcast.lane.b32.xlu0 %v1457, 256
      %v1460 = vpop.permute.xlu0 %1459
      %s1462 = sor.u32 256, 8
      %1463 = vbcast.lane.b32.xlu0 %v1457, %s1462
      %v1464 = vpop.permute.xlu0 %1463
      %s1466 = sor.u32 256, 16
      %1467 = vbcast.lane.b32.xlu0 %v1457, %s1466
      %v1468 = vpop.permute.xlu0 %1467
      %s1470 = sor.u32 256, 24
      %1471 = vbcast.lane.b32.xlu0 %v1457, %s1470
      %v1472 = vpop.permute.xlu0 %1471
      %s1474 = sor.u32 256, 32
      %1475 = vbcast.lane.b32.xlu0 %v1457, %s1474
      %v1476 = vpop.permute.xlu0 %1475
      %s1478 = sor.u32 256, 40
      %1479 = vbcast.lane.b32.xlu0 %v1457, %s1478
      %v1480 = vpop.permute.xlu0 %1479
      %s1482 = sor.u32 256, 48
      %1483 = vbcast.lane.b32.xlu0 %v1457, %s1482
      %v1484 = vpop.permute.xlu0 %1483
      %s1486 = sor.u32 256, 56
      %1487 = vbcast.lane.b32.xlu0 %v1457, %s1486
      %v1488 = vpop.permute.xlu0 %1487
      %v1489 = vlaneseq
      %v1490 = vshrl.u32 %v1489, 7
      %v1491 = vsub.s32 7, %v1490
      %v1492 = vrot.slane %v886, %v1491
      %v1493 = vsub.f32 %v1460, %v1492
      %v1494 = vsub.f32 %v1464, %v1492
      %v1495 = vsub.f32 %v1468, %v1492
      %v1496 = vsub.f32 %v1472, %v1492
      %v1497 = vsub.f32 %v1476, %v1492
      %v1498 = vsub.f32 %v1480, %v1492
      %v1499 = vsub.f32 %v1484, %v1492
      %v1500 = vsub.f32 %v1488, %v1492
      %v1501 = vmax.f32 %v1493, 0.0
      %v1502 = vmax.f32 %v1494, 0.0
      %v1503 = vmax.f32 %v1495, 0.0
      %v1504 = vmax.f32 %v1496, 0.0
      %v1505 = vmax.f32 %v1497, 0.0
      %v1506 = vmax.f32 %v1498, 0.0
      %v1507 = vmax.f32 %v1499, 0.0
      %v1508 = vmax.f32 %v1500, 0.0
      %v1509 = vsel %vm889, %v1501, 0.0
      %v1510 = vsel %vm889, %v1502, 0.0
      %v1511 = vadd.f32 %v1509, %v1510
      %v1512 = vsel %vm889, %v1503, 0.0
      %v1513 = vadd.f32 %v1511, %v1512
      %v1514 = vsel %vm889, %v1504, 0.0
      %v1515 = vadd.f32 %v1513, %v1514
      %v1516 = vsel %vm889, %v1505, 0.0
      %v1517 = vadd.f32 %v1515, %v1516
      %v1518 = vsel %vm889, %v1506, 0.0
      %v1519 = vadd.f32 %v1517, %v1518
      %v1520 = vsel %vm889, %v1507, 0.0
      %v1521 = vadd.f32 %v1519, %v1520
      %v1522 = vsel %vm889, %v1508, 0.0
      %v1523 = vadd.f32 %v1521, %v1522
      %1524 = vadd.xlane.f32.xlu0 %v1523
      %v1525 = vpop.xlane.xlu0 %1524
      %v1526 = vrot.slane %v1525, 4
      %v1527 = vadd.f32 %v1525, %v1526
      %v1528 = vrot.slane %v1527, 2
      %v1529 = vadd.f32 %v1527, %v1528
      %v1530 = vrot.slane %v1529, 1
      %v1531 = vadd.f32 %v1529, %v1530
      %s1532 = vtos %v1531
      %v1533 = vstv %s1532
      %vm1534 = vcmask 1040384
      %v1535 = vsel %vm1534, %v973, %v1053
      %vm1536 = vcmask 1041408
      %v1537 = vsel %vm1536, %v1535, %v1133
      %vm1538 = vcmask 1042432
      %v1539 = vsel %vm1538, %v1537, %v1213
      %vm1540 = vcmask 1043456
      %v1541 = vsel %vm1540, %v1539, %v1293
      %vm1542 = vcmask 1044480
      %v1543 = vsel %vm1542, %v1541, %v1373
      %vm1544 = vcmask 1045504
      %v1545 = vsel %vm1544, %v1543, %v1453
      %vm1546 = vcmask 1046528
      %v1547 = vsel %vm1546, %v1545, %v1533
      %1548 = vst [vmem:[%s199] sm:$0xff] %v1547
      %p1549 = scmp.lt.s32.totalorder %s16, 7
      %s1550 = scalar_select %p1549, %s16, 7
      %s1551 = smul.addr %s1550, 8
      %s1552 = scalar_lea.vmem %s3, %s1551
      %p1553 = scmp.lt.s32.totalorder %s16, 7
      %s1554 = scalar_select %p1553, %s16, 7
      %s1555 = smul.addr %s1554, 8
      %s1556 = scalar_lea.vmem %s4, %s1555
      // Predicated region
      $region33: #{ba_triplet_loss.1} parent=31 // pred_check
        %p1557 = pneg %p102
      $region34: #{ba_triplet_loss.1} parent=31 // pred_check_branch
        %1559 = sbr.rel (%p1557) target = $region36
      $region35: #{ba_triplet_loss.1} parent=31 // pred_region
        _
      $region36: #{ba_triplet_loss.1} parent=31 // pred_fallthru
        _
      // Predicated region
      $region37: #{ba_triplet_loss.1} parent=31 // pred_check
        %p1560 = pneg %p128
      $region38: #{ba_triplet_loss.1} parent=31 // pred_check_branch
        %1562 = sbr.rel (%p1560) target = $region40
      $region39: #{ba_triplet_loss.1} parent=31 // pred_region
        _
      $region40: #{ba_triplet_loss.1} parent=31 // pred_fallthru
        _
    $region32: #{ba_triplet_loss.1} parent=5 // pred_fallthru
      _
    %p1563 = scmp.le.s32.totalorder 2, %s11
    // Predicated region
    $region41: #{ba_triplet_loss.1} parent=5 // pred_check
      %p1564 = pneg %p1563
    $region42: #{ba_triplet_loss.1} parent=5 // pred_check_branch
      %1566 = sbr.rel (%p1564) target = $region44
    $region43: #{ba_triplet_loss.1} parent=5 // pred_region
      %s1567 = ssub.s32 %s11, 2
      // Predicated region
      $region45: #{ba_triplet_loss.1} parent=43 // pred_check
        %p1568 = pneg %p108
      $region46: #{ba_triplet_loss.1} parent=43 // pred_check_branch
        %1570 = sbr.rel (%p1568) target = $region48
      $region47: #{ba_triplet_loss.1} parent=43 // pred_region
        %p1571 = scmp.lt.s32.totalorder %s17, 7
        %s1572 = scalar_select %p1571, %s17, 7
        %s1573 = smul.addr %s1572, 8
        %s1574 = scalar_lea.vmem %s3, %s1573
      $region48: #{ba_triplet_loss.1} parent=43 // pred_fallthru
        _
      // Predicated region
      $region49: #{ba_triplet_loss.1} parent=43 // pred_check
        %p1575 = pneg %p134
      $region50: #{ba_triplet_loss.1} parent=43 // pred_check_branch
        %1577 = sbr.rel (%p1575) target = $region52
      $region51: #{ba_triplet_loss.1} parent=43 // pred_region
        %p1578 = scmp.lt.s32.totalorder %s17, 7
        %s1579 = scalar_select %p1578, %s17, 7
        %s1580 = smul.addr %s1579, 8
        %s1581 = scalar_lea.vmem %s4, %s1580
      $region52: #{ba_triplet_loss.1} parent=43 // pred_fallthru
        _
    $region44: #{ba_triplet_loss.1} parent=5 // pred_fallthru
      _
  $region6: #{ba_triplet_loss.1} parent=0 // loop_footer
    %s15 = sadd.s32 1, %s11
  $region7: #{ba_triplet_loss.1} parent=0 // loop_footer_branch
    %10 = sbr.rel target = $region3
  $region8: #{ba_triplet_loss.1} parent=0 // loop_exit
    _

</llo_original>
